<compile_context>
chip_gen: v6e
topology: v6e:2x2x1
jax: 0.10.0
libtpu: 0.0.40
codegen_flags: <defaults>
</compile_context>

<pallas_src>
import functools

import jax
import jax.numpy as jnp
from jax.experimental import pallas as pl
from jax.experimental.pallas import tpu as pltpu

LANE = 128  # pad every feature dimension up to one full vreg lane width


def mlp_kernel(x_ref, ws_ref, bs_ref, o_ref):
    """Fused 6-layer MLP on one (BT, 128) batch tile.

    x_ref : (BT, 128)       bf16 padded activations (lane-dense)
    ws_ref: (L, 128, 128)   bf16 stacked, zero-padded weights, (in, out) layout
    bs_ref: (L, 1, 128)     f32  stacked, zero-padded biases
    o_ref : (BT, 128)       f32  padded output (lane-dense store)
    """
    n_layers = ws_ref.shape[0]
    z = x_ref[...]                                      # bf16
    for l in range(n_layers):                           # static, unrolled loop
        # bf16 x bf16 -> f32 accumulation: single MXU pass on all generations.
        y = jnp.dot(z, ws_ref[l], preferred_element_type=jnp.float32)
        y = y + bs_ref[l]                               # f32 bias broadcasts over rows
        if l < n_layers - 1:
            z = jnp.maximum(y, 0.0).astype(jnp.bfloat16)   # ReLU (VPU), back to bf16
        else:
            z = y                                       # keep final logits in f32
    o_ref[...] = z.astype(o_ref.dtype)


def _pad2d(a, rows, cols):
    return jnp.pad(a, ((0, rows - a.shape[0]), (0, cols - a.shape[1])))


def pack_params(params, pad=LANE):
    """Stack per-layer (W:(in,out), b:(1,out)) into lane-dense slabs.

    INVARIANT (do not break): padded lanes are exactly zero and every op in the
    kernel maps 0 -> 0 (x @ W with zero columns, +0 bias, ReLU), so padded
    lanes can never leak into the real output columns.  If a layer is ever
    changed to softmax / layernorm / a non-zero-padded bias, this packing must
    be revisited.

    Weights are stored bf16 (MXU-native operand, halves the weight DMA);
    biases stay f32 and are added on the f32 accumulator.
    """
    ws = jnp.stack([_pad2d(w, pad, pad) for w, _ in params]).astype(jnp.bfloat16)
    bs = jnp.stack([_pad2d(b, 1, pad) for _, b in params]).astype(jnp.float32)
    return ws, bs


def _pick_tiling(batch):
    """Pick (batch_tile, padded_batch)."""
    if batch <= 128:
        # Launch/DMA-latency bound regime: nothing inside the kernel is on the
        # critical path.  Callers should fold more rows into a single call
        # (micro-batching) if they need lower wall clock here.
        bt = ((batch + 7) // 8) * 8
        return bt, bt
    # Large tiles amortize the ~0.35us/grid-step overhead; choosing bt ~= half
    # the batch (capped at 1024, multiple of 128) guarantees >= 2 grid steps,
    # so the "parallel" batch axis shards across both TensorCores on v7x.
    half = (((batch + 1) // 2 + 127) // 128) * 128
    bt = min(1024, half)
    bp = ((batch + bt - 1) // bt) * bt
    return bt, bp


@functools.partial(jax.jit,
                   static_argnames=("num_classes", "bt", "bp", "wb_bufs"))
def _mlp_forward(x, ws, bs, *, num_classes, bt, bp, wb_bufs):
    batch, in_dim = x.shape
    n_layers, pad, _ = ws.shape

    # Pad batch and features; activations go to bf16 (MXU operand dtype).
    xp = jnp.pad(x, ((0, bp - batch), (0, pad - in_dim))).astype(jnp.bfloat16)

    # Weight/bias blocks have a constant block index across the grid: request
    # single-buffering so the pipeliner doesn't hold a redundant second copy.
    wb_mode = pl.Buffered(wb_bufs) if wb_bufs else None

    out_padded = pl.pallas_call(
        mlp_kernel,
        out_shape=jax.ShapeDtypeStruct((bp, pad), jnp.float32),
        grid=(bp // bt,),
        in_specs=[
            pl.BlockSpec((bt, pad), lambda i: (i, 0)),          # activations (pipelined)
            pl.BlockSpec((n_layers, pad, pad), lambda i: (0, 0, 0),
                         pipeline_mode=wb_mode),                # weights (grid-invariant)
            pl.BlockSpec((n_layers, 1, pad), lambda i: (0, 0, 0),
                         pipeline_mode=wb_mode),                # biases (grid-invariant)
        ],
        out_specs=pl.BlockSpec((bt, pad), lambda i: (i, 0)),
        compiler_params=pltpu.CompilerParams(
            dimension_semantics=("parallel",),      # batch tiles are independent
            vmem_limit_bytes=32 * 1024 * 1024,      # explicit; plenty of headroom
        ),
    )(xp, ws, bs)

    return out_padded[:batch, :num_classes]


def mlp_forward(x, ws, bs, *, num_classes):
    bt, bp = _pick_tiling(x.shape[0])
    try:
        return _mlp_forward(x, ws, bs, num_classes=num_classes,
                            bt=bt, bp=bp, wb_bufs=1)
    except Exception:
        # pl.Buffered(1) hint unsupported on this jax/libtpu build: fall back
        # to default double-buffered specs (numerically identical).
        return _mlp_forward(x, ws, bs, num_classes=num_classes,
                            bt=bt, bp=bp, wb_bufs=0)


def init_params(key, input_dim, hidden_dim, num_classes):
    """Deterministic init mimicking PyTorch Linear's U(-1/sqrt(in), 1/sqrt(in)).

    Weights stored as (in, out) so y = x @ W + b; biases as (1, out).
    """
    dims = [
        (input_dim, input_dim * 2),
        (input_dim * 2, hidden_dim),
        (hidden_dim, hidden_dim // 2),
        (hidden_dim // 2, hidden_dim // 4),
        (hidden_dim // 4, hidden_dim // 8),
        (hidden_dim // 8, num_classes),
    ]
    params = []
    for (fan_in, fan_out) in dims:
        key, kw, kb = jax.random.split(key, 3)
        bound = 1.0 / jnp.sqrt(jnp.float32(fan_in))
        w = jax.random.uniform(kw, (fan_in, fan_out), jnp.float32, -bound, bound)
        b = jax.random.uniform(kb, (1, fan_out), jnp.float32, -bound, bound)
        params.append((w, b))
    return params


def mlp_reference(x, params):
    """Pure-f32 JAX reference matching the PyTorch module."""
    z = x
    for i, (w, b) in enumerate(params):
        z = z @ w + b
        if i < len(params) - 1:
            z = jnp.maximum(z, 0.0)
    return z


if __name__ == "__main__":
    # Small shapes consistent with the module: hidden_dim divisible by 8.
    batch, input_dim, hidden_dim, num_classes = 8, 32, 32, 10

    key = jax.random.PRNGKey(0)
    key, kx = jax.random.split(key)
    x = jax.random.normal(kx, (batch, input_dim), jnp.float32)
    params = init_params(key, input_dim, hidden_dim, num_classes)

    ws, bs = pack_params(params)            # packed once, reused every call

    # Small-batch (launch-bound) path.
    out = jax.block_until_ready(mlp_forward(x, ws, bs, num_classes=num_classes))
    ref = mlp_reference(x, params)
    assert out.shape == (batch, num_classes), out.shape
    # bf16 MXU operands -> ~1e-2 relative agreement with the f32 reference.
    assert jnp.allclose(out, ref, atol=5e-2, rtol=5e-2), "mismatch vs reference (small batch)"

    # Large-batch tiled path (grid >= 2: engages both TensorCores on v7x).
    big_batch = 384
    xb = jax.random.normal(jax.random.PRNGKey(1), (big_batch, input_dim), jnp.float32)
    outb = jax.block_until_ready(mlp_forward(xb, ws, bs, num_classes=num_classes))
    refb = mlp_reference(xb, params)
    assert outb.shape == (big_batch, num_classes), outb.shape
    assert jnp.allclose(outb, refb, atol=5e-2, rtol=5e-2), "mismatch vs reference (large batch)"

    print("KERNEL_OK")
</pallas_src>

<mosaic_0001>
module attributes {stable_mosaic.version = 11 : i64} {
  func.func @mlp_kernel(%arg0: i32, %arg1: memref<8x128xbf16, #tpu.memory_space<vmem>>, %arg2: memref<6x128x128xbf16, #tpu.memory_space<vmem>>, %arg3: memref<6x1x128xf32, #tpu.memory_space<vmem>>, %arg4: memref<8x128xf32, #tpu.memory_space<vmem>>) attributes {dimension_semantics = [#tpu.dimension_semantics<parallel>], iteration_bounds = array<i64: 1>, scalar_prefetch = 0 : i64, scratch_operands = 0 : i64, tpu.core_type = #tpu.core_type<tc>, window_params = [{transform_indices = @transform_0, window_bounds = array<i64: 8, 128>}, {pipeline_mode = #tpu.pipeline_mode<synchronous>, transform_indices = @transform_1, window_bounds = array<i64: 6, 128, 128>}, {pipeline_mode = #tpu.pipeline_mode<synchronous>, transform_indices = @transform_2, window_bounds = array<i64: 6, 1, 128>}, {transform_indices = @transform_3, window_bounds = array<i64: 8, 128>}]} {
    %c0 = arith.constant 0 : index
    %c0_0 = arith.constant 0 : index
    %0 = vector.load %arg1[%c0, %c0_0] : memref<8x128xbf16, #tpu.memory_space<vmem>>, vector<8x128xbf16>
    %c0_1 = arith.constant 0 : index
    %c0_2 = arith.constant 0 : index
    %c0_3 = arith.constant 0 : index
    %1 = vector.load %arg2[%c0_1, %c0_2, %c0_3] : memref<6x128x128xbf16, #tpu.memory_space<vmem>>, vector<1x128x128xbf16>
    %2 = vector.shape_cast %1 : vector<1x128x128xbf16> to vector<128x128xbf16>
    %cst = arith.constant dense<0.000000e+00> : vector<8x128xf32>
    %3 = tpu.matmul %0, %2, %cst {dimension_numbers = #tpu.dot_dimension_numbers<[1], [0], [0], [1], [0, 0, 1, 1], [], []>} : vector<8x128xbf16>, vector<128x128xbf16>, vector<8x128xf32> -> vector<8x128xf32>
    %c0_4 = arith.constant 0 : index
    %c0_5 = arith.constant 0 : index
    %c0_6 = arith.constant 0 : index
    %4 = vector.load %arg3[%c0_4, %c0_5, %c0_6] : memref<6x1x128xf32, #tpu.memory_space<vmem>>, vector<1x1x128xf32>
    %5 = vector.shape_cast %4 : vector<1x1x128xf32> to vector<1x128xf32>
    %6 = vector.broadcast %5 : vector<1x128xf32> to vector<8x128xf32>
    %7 = arith.addf %3, %6 : vector<8x128xf32>
    %cst_7 = arith.constant 0.000000e+00 : f32
    %8 = vector.broadcast %cst_7 : f32 to vector<8x128xf32>
    %9 = arith.maximumf %7, %8 : vector<8x128xf32>
    %10 = arith.truncf %9 : vector<8x128xf32> to vector<8x128xbf16>
    %c1 = arith.constant 1 : index
    %c0_8 = arith.constant 0 : index
    %c0_9 = arith.constant 0 : index
    %11 = vector.load %arg2[%c1, %c0_8, %c0_9] : memref<6x128x128xbf16, #tpu.memory_space<vmem>>, vector<1x128x128xbf16>
    %12 = vector.shape_cast %11 : vector<1x128x128xbf16> to vector<128x128xbf16>
    %cst_10 = arith.constant dense<0.000000e+00> : vector<8x128xf32>
    %13 = tpu.matmul %10, %12, %cst_10 {dimension_numbers = #tpu.dot_dimension_numbers<[1], [0], [0], [1], [0, 0, 1, 1], [], []>} : vector<8x128xbf16>, vector<128x128xbf16>, vector<8x128xf32> -> vector<8x128xf32>
    %c1_11 = arith.constant 1 : index
    %c0_12 = arith.constant 0 : index
    %c0_13 = arith.constant 0 : index
    %14 = vector.load %arg3[%c1_11, %c0_12, %c0_13] : memref<6x1x128xf32, #tpu.memory_space<vmem>>, vector<1x1x128xf32>
    %15 = vector.shape_cast %14 : vector<1x1x128xf32> to vector<1x128xf32>
    %16 = vector.broadcast %15 : vector<1x128xf32> to vector<8x128xf32>
    %17 = arith.addf %13, %16 : vector<8x128xf32>
    %cst_14 = arith.constant 0.000000e+00 : f32
    %18 = vector.broadcast %cst_14 : f32 to vector<8x128xf32>
    %19 = arith.maximumf %17, %18 : vector<8x128xf32>
    %20 = arith.truncf %19 : vector<8x128xf32> to vector<8x128xbf16>
    %c2 = arith.constant 2 : index
    %c0_15 = arith.constant 0 : index
    %c0_16 = arith.constant 0 : index
    %21 = vector.load %arg2[%c2, %c0_15, %c0_16] : memref<6x128x128xbf16, #tpu.memory_space<vmem>>, vector<1x128x128xbf16>
    %22 = vector.shape_cast %21 : vector<1x128x128xbf16> to vector<128x128xbf16>
    %cst_17 = arith.constant dense<0.000000e+00> : vector<8x128xf32>
    %23 = tpu.matmul %20, %22, %cst_17 {dimension_numbers = #tpu.dot_dimension_numbers<[1], [0], [0], [1], [0, 0, 1, 1], [], []>} : vector<8x128xbf16>, vector<128x128xbf16>, vector<8x128xf32> -> vector<8x128xf32>
    %c2_18 = arith.constant 2 : index
    %c0_19 = arith.constant 0 : index
    %c0_20 = arith.constant 0 : index
    %24 = vector.load %arg3[%c2_18, %c0_19, %c0_20] : memref<6x1x128xf32, #tpu.memory_space<vmem>>, vector<1x1x128xf32>
    %25 = vector.shape_cast %24 : vector<1x1x128xf32> to vector<1x128xf32>
    %26 = vector.broadcast %25 : vector<1x128xf32> to vector<8x128xf32>
    %27 = arith.addf %23, %26 : vector<8x128xf32>
    %cst_21 = arith.constant 0.000000e+00 : f32
    %28 = vector.broadcast %cst_21 : f32 to vector<8x128xf32>
    %29 = arith.maximumf %27, %28 : vector<8x128xf32>
    %30 = arith.truncf %29 : vector<8x128xf32> to vector<8x128xbf16>
    %c3 = arith.constant 3 : index
    %c0_22 = arith.constant 0 : index
    %c0_23 = arith.constant 0 : index
    %31 = vector.load %arg2[%c3, %c0_22, %c0_23] : memref<6x128x128xbf16, #tpu.memory_space<vmem>>, vector<1x128x128xbf16>
    %32 = vector.shape_cast %31 : vector<1x128x128xbf16> to vector<128x128xbf16>
    %cst_24 = arith.constant dense<0.000000e+00> : vector<8x128xf32>
    %33 = tpu.matmul %30, %32, %cst_24 {dimension_numbers = #tpu.dot_dimension_numbers<[1], [0], [0], [1], [0, 0, 1, 1], [], []>} : vector<8x128xbf16>, vector<128x128xbf16>, vector<8x128xf32> -> vector<8x128xf32>
    %c3_25 = arith.constant 3 : index
    %c0_26 = arith.constant 0 : index
    %c0_27 = arith.constant 0 : index
    %34 = vector.load %arg3[%c3_25, %c0_26, %c0_27] : memref<6x1x128xf32, #tpu.memory_space<vmem>>, vector<1x1x128xf32>
    %35 = vector.shape_cast %34 : vector<1x1x128xf32> to vector<1x128xf32>
    %36 = vector.broadcast %35 : vector<1x128xf32> to vector<8x128xf32>
    %37 = arith.addf %33, %36 : vector<8x128xf32>
    %cst_28 = arith.constant 0.000000e+00 : f32
    %38 = vector.broadcast %cst_28 : f32 to vector<8x128xf32>
    %39 = arith.maximumf %37, %38 : vector<8x128xf32>
    %40 = arith.truncf %39 : vector<8x128xf32> to vector<8x128xbf16>
    %c4 = arith.constant 4 : index
    %c0_29 = arith.constant 0 : index
    %c0_30 = arith.constant 0 : index
    %41 = vector.load %arg2[%c4, %c0_29, %c0_30] : memref<6x128x128xbf16, #tpu.memory_space<vmem>>, vector<1x128x128xbf16>
    %42 = vector.shape_cast %41 : vector<1x128x128xbf16> to vector<128x128xbf16>
    %cst_31 = arith.constant dense<0.000000e+00> : vector<8x128xf32>
    %43 = tpu.matmul %40, %42, %cst_31 {dimension_numbers = #tpu.dot_dimension_numbers<[1], [0], [0], [1], [0, 0, 1, 1], [], []>} : vector<8x128xbf16>, vector<128x128xbf16>, vector<8x128xf32> -> vector<8x128xf32>
    %c4_32 = arith.constant 4 : index
    %c0_33 = arith.constant 0 : index
    %c0_34 = arith.constant 0 : index
    %44 = vector.load %arg3[%c4_32, %c0_33, %c0_34] : memref<6x1x128xf32, #tpu.memory_space<vmem>>, vector<1x1x128xf32>
    %45 = vector.shape_cast %44 : vector<1x1x128xf32> to vector<1x128xf32>
    %46 = vector.broadcast %45 : vector<1x128xf32> to vector<8x128xf32>
    %47 = arith.addf %43, %46 : vector<8x128xf32>
    %cst_35 = arith.constant 0.000000e+00 : f32
    %48 = vector.broadcast %cst_35 : f32 to vector<8x128xf32>
    %49 = arith.maximumf %47, %48 : vector<8x128xf32>
    %50 = arith.truncf %49 : vector<8x128xf32> to vector<8x128xbf16>
    %c5 = arith.constant 5 : index
    %c0_36 = arith.constant 0 : index
    %c0_37 = arith.constant 0 : index
    %51 = vector.load %arg2[%c5, %c0_36, %c0_37] : memref<6x128x128xbf16, #tpu.memory_space<vmem>>, vector<1x128x128xbf16>
    %52 = vector.shape_cast %51 : vector<1x128x128xbf16> to vector<128x128xbf16>
    %cst_38 = arith.constant dense<0.000000e+00> : vector<8x128xf32>
    %53 = tpu.matmul %50, %52, %cst_38 {dimension_numbers = #tpu.dot_dimension_numbers<[1], [0], [0], [1], [0, 0, 1, 1], [], []>} : vector<8x128xbf16>, vector<128x128xbf16>, vector<8x128xf32> -> vector<8x128xf32>
    %c5_39 = arith.constant 5 : index
    %c0_40 = arith.constant 0 : index
    %c0_41 = arith.constant 0 : index
    %54 = vector.load %arg3[%c5_39, %c0_40, %c0_41] : memref<6x1x128xf32, #tpu.memory_space<vmem>>, vector<1x1x128xf32>
    %55 = vector.shape_cast %54 : vector<1x1x128xf32> to vector<1x128xf32>
    %56 = vector.broadcast %55 : vector<1x128xf32> to vector<8x128xf32>
    %57 = arith.addf %53, %56 : vector<8x128xf32>
    %c0_42 = arith.constant 0 : index
    %c0_43 = arith.constant 0 : index
    %58 = vector.load %arg4[%c0_42, %c0_43] : memref<8x128xf32, #tpu.memory_space<vmem>>, vector<8x128xf32>
    tpu.vector_store %arg4[%c0_42, %c0_43], %57 {strides = array<i32>} : memref<8x128xf32, #tpu.memory_space<vmem>>, vector<8x128xf32>,
    return
  }
  func.func @transform_0(%arg0: i32) -> (i32, i32) {
    %c0_i32 = arith.constant 0 : i32
    %c0_i32_0 = arith.constant 0 : i32
    return %arg0, %c0_i32 : i32, i32
  }
  func.func @transform_1(%arg0: i32) -> (i32, i32, i32) {
    %c0_i32 = arith.constant 0 : i32
    %c0_i32_0 = arith.constant 0 : i32
    %c0_i32_1 = arith.constant 0 : i32
    %c0_i32_2 = arith.constant 0 : i32
    return %c0_i32, %c0_i32_0, %c0_i32_1 : i32, i32, i32
  }
  func.func @transform_2(%arg0: i32) -> (i32, i32, i32) {
    %c0_i32 = arith.constant 0 : i32
    %c0_i32_0 = arith.constant 0 : i32
    %c0_i32_1 = arith.constant 0 : i32
    %c0_i32_2 = arith.constant 0 : i32
    return %c0_i32, %c0_i32_0, %c0_i32_1 : i32, i32, i32
  }
  func.func @transform_3(%arg0: i32) -> (i32, i32) {
    %c0_i32 = arith.constant 0 : i32
    %c0_i32_0 = arith.constant 0 : i32
    return %arg0, %c0_i32 : i32, i32
  }
}

module attributes {stable_mosaic.version = 11 : i64} {
  func.func @mlp_kernel(%arg0: i32, %arg1: memref<8x128xbf16, #tpu.memory_space<vmem>>, %arg2: memref<6x128x128xbf16, #tpu.memory_space<vmem>>, %arg3: memref<6x1x128xf32, #tpu.memory_space<vmem>>, %arg4: memref<8x128xf32, #tpu.memory_space<vmem>>) attributes {dimension_semantics = [#tpu.dimension_semantics<parallel>], iteration_bounds = array<i64: 1>, scalar_prefetch = 0 : i64, scratch_operands = 0 : i64, tpu.core_type = #tpu.core_type<tc>, window_params = [{transform_indices = @transform_0, window_bounds = array<i64: 8, 128>}, {pipeline_mode = #tpu.pipeline_mode<synchronous>, transform_indices = @transform_1, window_bounds = array<i64: 6, 128, 128>}, {pipeline_mode = #tpu.pipeline_mode<synchronous>, transform_indices = @transform_2, window_bounds = array<i64: 6, 1, 128>}, {transform_indices = @transform_3, window_bounds = array<i64: 8, 128>}]} {
    %c0 = arith.constant 0 : index
    %c0_0 = arith.constant 0 : index
    %0 = vector.load %arg1[%c0, %c0_0] : memref<8x128xbf16, #tpu.memory_space<vmem>>, vector<8x128xbf16>
    %c0_1 = arith.constant 0 : index
    %c0_2 = arith.constant 0 : index
    %c0_3 = arith.constant 0 : index
    %1 = vector.load %arg2[%c0_1, %c0_2, %c0_3] : memref<6x128x128xbf16, #tpu.memory_space<vmem>>, vector<1x128x128xbf16>
    %2 = vector.shape_cast %1 : vector<1x128x128xbf16> to vector<128x128xbf16>
    %cst = arith.constant dense<0.000000e+00> : vector<8x128xf32>
    %3 = tpu.matmul %0, %2, %cst {dimension_numbers = #tpu.dot_dimension_numbers<[1], [0], [0], [1], [0, 0, 1, 1], [], []>} : vector<8x128xbf16>, vector<128x128xbf16>, vector<8x128xf32> -> vector<8x128xf32>
    %c0_4 = arith.constant 0 : index
    %c0_5 = arith.constant 0 : index
    %c0_6 = arith.constant 0 : index
    %4 = vector.load %arg3[%c0_4, %c0_5, %c0_6] : memref<6x1x128xf32, #tpu.memory_space<vmem>>, vector<1x1x128xf32>
    %5 = vector.shape_cast %4 : vector<1x1x128xf32> to vector<1x128xf32>
    %6 = vector.broadcast %5 : vector<1x128xf32> to vector<8x128xf32>
    %7 = arith.addf %3, %6 : vector<8x128xf32>
    %cst_7 = arith.constant 0.000000e+00 : f32
    %8 = vector.broadcast %cst_7 : f32 to vector<8x128xf32>
    %9 = arith.maximumf %7, %8 : vector<8x128xf32>
    %10 = arith.truncf %9 : vector<8x128xf32> to vector<8x128xbf16>
    %c1 = arith.constant 1 : index
    %c0_8 = arith.constant 0 : index
    %c0_9 = arith.constant 0 : index
    %11 = vector.load %arg2[%c1, %c0_8, %c0_9] : memref<6x128x128xbf16, #tpu.memory_space<vmem>>, vector<1x128x128xbf16>
    %12 = vector.shape_cast %11 : vector<1x128x128xbf16> to vector<128x128xbf16>
    %cst_10 = arith.constant dense<0.000000e+00> : vector<8x128xf32>
    %13 = tpu.matmul %10, %12, %cst_10 {dimension_numbers = #tpu.dot_dimension_numbers<[1], [0], [0], [1], [0, 0, 1, 1], [], []>} : vector<8x128xbf16>, vector<128x128xbf16>, vector<8x128xf32> -> vector<8x128xf32>
    %c1_11 = arith.constant 1 : index
    %c0_12 = arith.constant 0 : index
    %c0_13 = arith.constant 0 : index
    %14 = vector.load %arg3[%c1_11, %c0_12, %c0_13] : memref<6x1x128xf32, #tpu.memory_space<vmem>>, vector<1x1x128xf32>
    %15 = vector.shape_cast %14 : vector<1x1x128xf32> to vector<1x128xf32>
    %16 = vector.broadcast %15 : vector<1x128xf32> to vector<8x128xf32>
    %17 = arith.addf %13, %16 : vector<8x128xf32>
    %cst_14 = arith.constant 0.000000e+00 : f32
    %18 = vector.broadcast %cst_14 : f32 to vector<8x128xf32>
    %19 = arith.maximumf %17, %18 : vector<8x128xf32>
    %20 = arith.truncf %19 : vector<8x128xf32> to vector<8x128xbf16>
    %c2 = arith.constant 2 : index
    %c0_15 = arith.constant 0 : index
    %c0_16 = arith.constant 0 : index
    %21 = vector.load %arg2[%c2, %c0_15, %c0_16] : memref<6x128x128xbf16, #tpu.memory_space<vmem>>, vector<1x128x128xbf16>
    %22 = vector.shape_cast %21 : vector<1x128x128xbf16> to vector<128x128xbf16>
    %cst_17 = arith.constant dense<0.000000e+00> : vector<8x128xf32>
    %23 = tpu.matmul %20, %22, %cst_17 {dimension_numbers = #tpu.dot_dimension_numbers<[1], [0], [0], [1], [0, 0, 1, 1], [], []>} : vector<8x128xbf16>, vector<128x128xbf16>, vector<8x128xf32> -> vector<8x128xf32>
    %c2_18 = arith.constant 2 : index
    %c0_19 = arith.constant 0 : index
    %c0_20 = arith.constant 0 : index
    %24 = vector.load %arg3[%c2_18, %c0_19, %c0_20] : memref<6x1x128xf32, #tpu.memory_space<vmem>>, vector<1x1x128xf32>
    %25 = vector.shape_cast %24 : vector<1x1x128xf32> to vector<1x128xf32>
    %26 = vector.broadcast %25 : vector<1x128xf32> to vector<8x128xf32>
    %27 = arith.addf %23, %26 : vector<8x128xf32>
    %cst_21 = arith.constant 0.000000e+00 : f32
    %28 = vector.broadcast %cst_21 : f32 to vector<8x128xf32>
    %29 = arith.maximumf %27, %28 : vector<8x128xf32>
    %30 = arith.truncf %29 : vector<8x128xf32> to vector<8x128xbf16>
    %c3 = arith.constant 3 : index
    %c0_22 = arith.constant 0 : index
    %c0_23 = arith.constant 0 : index
    %31 = vector.load %arg2[%c3, %c0_22, %c0_23] : memref<6x128x128xbf16, #tpu.memory_space<vmem>>, vector<1x128x128xbf16>
    %32 = vector.shape_cast %31 : vector<1x128x128xbf16> to vector<128x128xbf16>
    %cst_24 = arith.constant dense<0.000000e+00> : vector<8x128xf32>
    %33 = tpu.matmul %30, %32, %cst_24 {dimension_numbers = #tpu.dot_dimension_numbers<[1], [0], [0], [1], [0, 0, 1, 1], [], []>} : vector<8x128xbf16>, vector<128x128xbf16>, vector<8x128xf32> -> vector<8x128xf32>
    %c3_25 = arith.constant 3 : index
    %c0_26 = arith.constant 0 : index
    %c0_27 = arith.constant 0 : index
    %34 = vector.load %arg3[%c3_25, %c0_26, %c0_27] : memref<6x1x128xf32, #tpu.memory_space<vmem>>, vector<1x1x128xf32>
    %35 = vector.shape_cast %34 : vector<1x1x128xf32> to vector<1x128xf32>
    %36 = vector.broadcast %35 : vector<1x128xf32> to vector<8x128xf32>
    %37 = arith.addf %33, %36 : vector<8x128xf32>
    %cst_28 = arith.constant 0.000000e+00 : f32
    %38 = vector.broadcast %cst_28 : f32 to vector<8x128xf32>
    %39 = arith.maximumf %37, %38 : vector<8x128xf32>
    %40 = arith.truncf %39 : vector<8x128xf32> to vector<8x128xbf16>
    %c4 = arith.constant 4 : index
    %c0_29 = arith.constant 0 : index
    %c0_30 = arith.constant 0 : index
    %41 = vector.load %arg2[%c4, %c0_29, %c0_30] : memref<6x128x128xbf16, #tpu.memory_space<vmem>>, vector<1x128x128xbf16>
    %42 = vector.shape_cast %41 : vector<1x128x128xbf16> to vector<128x128xbf16>
    %cst_31 = arith.constant dense<0.000000e+00> : vector<8x128xf32>
    %43 = tpu.matmul %40, %42, %cst_31 {dimension_numbers = #tpu.dot_dimension_numbers<[1], [0], [0], [1], [0, 0, 1, 1], [], []>} : vector<8x128xbf16>, vector<128x128xbf16>, vector<8x128xf32> -> vector<8x128xf32>
    %c4_32 = arith.constant 4 : index
    %c0_33 = arith.constant 0 : index
    %c0_34 = arith.constant 0 : index
    %44 = vector.load %arg3[%c4_32, %c0_33, %c0_34] : memref<6x1x128xf32, #tpu.memory_space<vmem>>, vector<1x1x128xf32>
    %45 = vector.shape_cast %44 : vector<1x1x128xf32> to vector<1x128xf32>
    %46 = vector.broadcast %45 : vector<1x128xf32> to vector<8x128xf32>
    %47 = arith.addf %43, %46 : vector<8x128xf32>
    %cst_35 = arith.constant 0.000000e+00 : f32
    %48 = vector.broadcast %cst_35 : f32 to vector<8x128xf32>
    %49 = arith.maximumf %47, %48 : vector<8x128xf32>
    %50 = arith.truncf %49 : vector<8x128xf32> to vector<8x128xbf16>
    %c5 = arith.constant 5 : index
    %c0_36 = arith.constant 0 : index
    %c0_37 = arith.constant 0 : index
    %51 = vector.load %arg2[%c5, %c0_36, %c0_37] : memref<6x128x128xbf16, #tpu.memory_space<vmem>>, vector<1x128x128xbf16>
    %52 = vector.shape_cast %51 : vector<1x128x128xbf16> to vector<128x128xbf16>
    %cst_38 = arith.constant dense<0.000000e+00> : vector<8x128xf32>
    %53 = tpu.matmul %50, %52, %cst_38 {dimension_numbers = #tpu.dot_dimension_numbers<[1], [0], [0], [1], [0, 0, 1, 1], [], []>} : vector<8x128xbf16>, vector<128x128xbf16>, vector<8x128xf32> -> vector<8x128xf32>
    %c5_39 = arith.constant 5 : index
    %c0_40 = arith.constant 0 : index
    %c0_41 = arith.constant 0 : index
    %54 = vector.load %arg3[%c5_39, %c0_40, %c0_41] : memref<6x1x128xf32, #tpu.memory_space<vmem>>, vector<1x1x128xf32>
    %55 = vector.shape_cast %54 : vector<1x1x128xf32> to vector<1x128xf32>
    %56 = vector.broadcast %55 : vector<1x128xf32> to vector<8x128xf32>
    %57 = arith.addf %53, %56 : vector<8x128xf32>
    %c0_42 = arith.constant 0 : index
    %c0_43 = arith.constant 0 : index
    %58 = vector.load %arg4[%c0_42, %c0_43] : memref<8x128xf32, #tpu.memory_space<vmem>>, vector<8x128xf32>
    tpu.vector_store %arg4[%c0_42, %c0_43], %57 {strides = array<i32>} : memref<8x128xf32, #tpu.memory_space<vmem>>, vector<8x128xf32>,
    return
  }
  func.func @transform_0(%arg0: i32) -> (i32, i32) {
    %c0_i32 = arith.constant 0 : i32
    %c0_i32_0 = arith.constant 0 : i32
    return %arg0, %c0_i32 : i32, i32
  }
  func.func @transform_1(%arg0: i32) -> (i32, i32, i32) {
    %c0_i32 = arith.constant 0 : i32
    %c0_i32_0 = arith.constant 0 : i32
    %c0_i32_1 = arith.constant 0 : i32
    %c0_i32_2 = arith.constant 0 : i32
    return %c0_i32, %c0_i32_0, %c0_i32_1 : i32, i32, i32
  }
  func.func @transform_2(%arg0: i32) -> (i32, i32, i32) {
    %c0_i32 = arith.constant 0 : i32
    %c0_i32_0 = arith.constant 0 : i32
    %c0_i32_1 = arith.constant 0 : i32
    %c0_i32_2 = arith.constant 0 : i32
    return %c0_i32, %c0_i32_0, %c0_i32_1 : i32, i32, i32
  }
  func.func @transform_3(%arg0: i32) -> (i32, i32) {
    %c0_i32 = arith.constant 0 : i32
    %c0_i32_0 = arith.constant 0 : i32
    return %arg0, %c0_i32 : i32, i32
  }
}

</mosaic_0001>

<llo_original>
// kernel: _mlp_forward.1
$region0: #{_mlp_forward.1}
  #allocation0 [shape = 'u32[]', space=smem, size = 0x4, offset = 0x4, fixed_abs, tag = 'smem constant byte address 0x4 - core index']
  #allocation1 [shape = 'u32[144,128]{1,0:T(1,128)}', space=vmem, size = 0x12000, scoped, tag = 'internal scratch']
  %s0 = inlined_call_operand.vmem [shape: bf16[8,128], index: 0, kind: input, shape index: {}]
  %s1 = inlined_call_operand.hbm [shape: bf16[6,128,128], index: 1, kind: input, shape index: {}]
  %s2 = inlined_call_operand.vmem [shape: f32[6,1,128], index: 2, kind: input, shape index: {}]
  %s3 = inlined_call_operand.hbm [shape: f32[8,128], index: 3, kind: output, shape index: {}]
  %s4 = sld [smem:[#allocation0]]
  $region26: #{_mlp_forward.1} parent=0
    _
  %s6 = ssub.s32 1, %s4
  %s7 = scalar_select 0, %s6, %s4
  $region1: #{_mlp_forward.1} parent=0
    #allocation2 [shape = 'u8[196608]{0}', space=vmem, size = 0x30000, scoped, tag = 'input window, operand 1, single buffered']
    #allocation3 [shape = 's32[1]{0}', space=sflag, size = 0x4, scoped, tag = 'scoped memory for _mlp_forward.1']
    #allocation4 [shape = 's32[1]{0}', space=sflag, size = 0x4, scoped, tag = 'scoped memory for _mlp_forward.1']
    #allocation5 [shape = 'u8[4096]{0}', space=vmem, size = 0x1000, scoped, tag = 'output window, operand 0, single buffered']
    %8 = vsyncpa [#allocation3], 0
    %9 = vsyncpa [#allocation4], 0
    // Predicated region
    $region2: #{_mlp_forward.1} parent=1 // pred_check
      _
    $region3: #{_mlp_forward.1} parent=1 // pred_check_branch
      %11 = sbr.rel (0) target = $region5
    $region4: #{_mlp_forward.1} parent=1 // pred_region
      _
    $region5: #{_mlp_forward.1} parent=1 // pred_fallthru
      _
    // Predicated region
    $region6: #{_mlp_forward.1} parent=1 // pred_check
      _
    $region7: #{_mlp_forward.1} parent=1 // pred_check_branch
      %13 = sbr.rel (0) target = $region9
    $region8: #{_mlp_forward.1} parent=1 // pred_region
      %s15 = ssub.s32 6144, 6144
      %16 = vsyncadd [#allocation3], %s15
      %s17 = sshll.u32 [#allocation2], 4
      %s18 = int_to_ptr.vmem [resolvable:$true] %s17
      %23 = dma.hbm_to_vmem [thread:$0]  %s1, 6144, %s18, [#allocation3], 64, 64, 4
    $region9: #{_mlp_forward.1} parent=1 // pred_fallthru
      _
    // Predicated region
    $region10: #{_mlp_forward.1} parent=1 // pred_check
      _
    $region11: #{_mlp_forward.1} parent=1 // pred_check_branch
      %25 = sbr.rel (0) target = $region13
    $region12: #{_mlp_forward.1} parent=1 // pred_region
      _
    $region13: #{_mlp_forward.1} parent=1 // pred_fallthru
      _
    // Predicated region
    $region14: #{_mlp_forward.1} parent=1 // pred_check
      _
    $region15: #{_mlp_forward.1} parent=1 // pred_check_branch
      %27 = sbr.rel (0) target = $region17
    $region16: #{_mlp_forward.1} parent=1 // pred_region
      %28 = dma.done [#allocation3], 6144
    $region17: #{_mlp_forward.1} parent=1 // pred_fallthru
      _
    %v30 = vld [vmem:[%s0] sm:$0xf]
    %v31 = vld [vmem:[#allocation2] sm:$0xf]
    %v32 = vld [vmem:[#allocation2 + $0x4] sm:$0xf]
    %v33 = vld [vmem:[#allocation2 + $0x8] sm:$0xf]
    %v34 = vld [vmem:[#allocation2 + $0xc] sm:$0xf]
    %v35 = vld [vmem:[#allocation2 + $0x10] sm:$0xf]
    %v36 = vld [vmem:[#allocation2 + $0x14] sm:$0xf]
    %v37 = vld [vmem:[#allocation2 + $0x18] sm:$0xf]
    %v38 = vld [vmem:[#allocation2 + $0x1c] sm:$0xf]
    %v39 = vld [vmem:[#allocation2 + $0x20] sm:$0xf]
    %v40 = vld [vmem:[#allocation2 + $0x24] sm:$0xf]
    %v41 = vld [vmem:[#allocation2 + $0x28] sm:$0xf]
    %v42 = vld [vmem:[#allocation2 + $0x2c] sm:$0xf]
    %v43 = vld [vmem:[#allocation2 + $0x30] sm:$0xf]
    %v44 = vld [vmem:[#allocation2 + $0x34] sm:$0xf]
    %v45 = vld [vmem:[#allocation2 + $0x38] sm:$0xf]
    %v46 = vld [vmem:[#allocation2 + $0x3c] sm:$0xf]
    %v47 = vld [vmem:[%s2] sm:$0x1]
    %v49 = vlaneseq
    %v50 = vshrl.u32 %v49, 7
    %v51 = vsub.s32 0, %v50
    %v52 = vrot.slane %v47, %v51
    %v70 = vunpack.c.l.b16 %v31
    %v71 = vunpack.c.l.b16 %v32
    %v72 = vunpack.c.l.b16 %v33
    %v73 = vunpack.c.l.b16 %v34
    %v74 = vunpack.c.l.b16 %v35
    %v75 = vunpack.c.l.b16 %v36
    %v76 = vunpack.c.l.b16 %v37
    %v77 = vunpack.c.l.b16 %v38
    %v78 = vunpack.c.l.b16 %v39
    %v79 = vunpack.c.l.b16 %v40
    %v80 = vunpack.c.l.b16 %v41
    %v81 = vunpack.c.l.b16 %v42
    %v82 = vunpack.c.l.b16 %v43
    %v83 = vunpack.c.l.b16 %v44
    %v84 = vunpack.c.l.b16 %v45
    %v85 = vunpack.c.l.b16 %v46
    %v86 = vpack.c.b16 %v71, %v70
    %v87 = vpack.c.b16 %v73, %v72
    %v88 = vpack.c.b16 %v75, %v74
    %v89 = vpack.c.b16 %v77, %v76
    %v90 = vpack.c.b16 %v79, %v78
    %v91 = vpack.c.b16 %v81, %v80
    %v92 = vpack.c.b16 %v83, %v82
    %v93 = vpack.c.b16 %v85, %v84
    %102 = vmatprep.subr.bf16.mxu0 0
    %103 = vmatpush1.bf16.msra.mxu0 %v93
    %104 = vmatprep.subr.bf16.mxu0 0
    %105 = vmatpush1.bf16.msra.mxu0 %v92
    %106 = vmatprep.subr.bf16.mxu0 0
    %107 = vmatpush1.bf16.msra.mxu0 %v91
    %108 = vmatprep.subr.bf16.mxu0 0
    %109 = vmatpush1.bf16.msra.mxu0 %v90
    %110 = vmatprep.subr.bf16.mxu0 0
    %111 = vmatpush1.bf16.msra.mxu0 %v89
    %112 = vmatprep.subr.bf16.mxu0 0
    %113 = vmatpush1.bf16.msra.mxu0 %v88
    %114 = vmatprep.subr.bf16.mxu0 0
    %115 = vmatpush1.bf16.msra.mxu0 %v87
    %116 = vmatprep.subr.bf16.mxu0 0
    %117 = vmatpush1.bf16.msra.mxu0 %v86
    %118 = vmatprep.subr.bf16.mxu0 0
    %119 = vmatpush2.bf16.msra.mxu0 0
    %120 = vmatprep.subr.bf16.mxu0 0
    %121 = vmatpush2.bf16.msra.mxu0 0
    %122 = vmatprep.subr.bf16.mxu0 0
    %123 = vmatpush2.bf16.msra.mxu0 0
    %124 = vmatprep.subr.bf16.mxu0 0
    %125 = vmatpush2.bf16.msra.mxu0 0
    %126 = vmatprep.subr.bf16.mxu0 0
    %127 = vmatpush2.bf16.msra.mxu0 0
    %128 = vmatprep.subr.bf16.mxu0 0
    %129 = vmatpush2.bf16.msra.mxu0 0
    %130 = vmatprep.subr.bf16.mxu0 0
    %131 = vmatpush2.bf16.msra.mxu0 0
    %132 = vmatprep.subr.bf16.mxu0 0
    %133 = vmatpush2.bf16.msra.mxu0 0
    %134 = vmatprep.mubr.bf16.mxu0 0
    %135 = vmatmul.mubr.bf16.gmra.mxu0 %v30
    %v136 = vpop.f32.mrf.mxu0
    %v137 = vadd.f32 %v52, %v136
    %v138 = vpop.f32.mrf.mxu0
    %v139 = vpop.f32.mrf.mxu0
    %v140 = vpop.f32.mrf.mxu0
    %141 = vdwg.mxu0
    %v142 = vmax.f32 %v137, 0.0
    %v143 = vpack.c.bf16 %v142, %v142
    %s144 = scalar_lea.vmem [#allocation2], 64
    %v145 = vld [vmem:[%s144] sm:$0xf]
    %v146 = vld [vmem:[%s144 + $0x4] sm:$0xf]
    %v147 = vld [vmem:[%s144 + $0x8] sm:$0xf]
    %v148 = vld [vmem:[%s144 + $0xc] sm:$0xf]
    %v149 = vld [vmem:[%s144 + $0x10] sm:$0xf]
    %v150 = vld [vmem:[%s144 + $0x14] sm:$0xf]
    %v151 = vld [vmem:[%s144 + $0x18] sm:$0xf]
    %v152 = vld [vmem:[%s144 + $0x1c] sm:$0xf]
    %v153 = vld [vmem:[%s144 + $0x20] sm:$0xf]
    %v154 = vld [vmem:[%s144 + $0x24] sm:$0xf]
    %v155 = vld [vmem:[%s144 + $0x28] sm:$0xf]
    %v156 = vld [vmem:[%s144 + $0x2c] sm:$0xf]
    %v157 = vld [vmem:[%s144 + $0x30] sm:$0xf]
    %v158 = vld [vmem:[%s144 + $0x34] sm:$0xf]
    %v159 = vld [vmem:[%s144 + $0x38] sm:$0xf]
    %v160 = vld [vmem:[%s144 + $0x3c] sm:$0xf]
    %s161 = scalar_lea.vmem %s2, 1
    %v162 = vld [vmem:[%s161] sm:$0x1]
    %v164 = vlaneseq
    %v165 = vshrl.u32 %v164, 7
    %v166 = vsub.s32 0, %v165
    %v167 = vrot.slane %v162, %v166
    %v185 = vunpack.c.l.b16 %v145
    %v186 = vunpack.c.l.b16 %v146
    %v187 = vunpack.c.l.b16 %v147
    %v188 = vunpack.c.l.b16 %v148
    %v189 = vunpack.c.l.b16 %v149
    %v190 = vunpack.c.l.b16 %v150
    %v191 = vunpack.c.l.b16 %v151
    %v192 = vunpack.c.l.b16 %v152
    %v193 = vunpack.c.l.b16 %v153
    %v194 = vunpack.c.l.b16 %v154
    %v195 = vunpack.c.l.b16 %v155
    %v196 = vunpack.c.l.b16 %v156
    %v197 = vunpack.c.l.b16 %v157
    %v198 = vunpack.c.l.b16 %v158
    %v199 = vunpack.c.l.b16 %v159
    %v200 = vunpack.c.l.b16 %v160
    %v201 = vpack.c.b16 %v186, %v185
    %v202 = vpack.c.b16 %v188, %v187
    %v203 = vpack.c.b16 %v190, %v189
    %v204 = vpack.c.b16 %v192, %v191
    %v205 = vpack.c.b16 %v194, %v193
    %v206 = vpack.c.b16 %v196, %v195
    %v207 = vpack.c.b16 %v198, %v197
    %v208 = vpack.c.b16 %v200, %v199
    %217 = vmatprep.subr.bf16.mxu0 0
    %218 = vmatpush1.bf16.msra.mxu0 %v208
    %219 = vmatprep.subr.bf16.mxu0 0
    %220 = vmatpush1.bf16.msra.mxu0 %v207
    %221 = vmatprep.subr.bf16.mxu0 0
    %222 = vmatpush1.bf16.msra.mxu0 %v206
    %223 = vmatprep.subr.bf16.mxu0 0
    %224 = vmatpush1.bf16.msra.mxu0 %v205
    %225 = vmatprep.subr.bf16.mxu0 0
    %226 = vmatpush1.bf16.msra.mxu0 %v204
    %227 = vmatprep.subr.bf16.mxu0 0
    %228 = vmatpush1.bf16.msra.mxu0 %v203
    %229 = vmatprep.subr.bf16.mxu0 0
    %230 = vmatpush1.bf16.msra.mxu0 %v202
    %231 = vmatprep.subr.bf16.mxu0 0
    %232 = vmatpush1.bf16.msra.mxu0 %v201
    %233 = vmatprep.subr.bf16.mxu0 0
    %234 = vmatpush2.bf16.msra.mxu0 0
    %235 = vmatprep.subr.bf16.mxu0 0
    %236 = vmatpush2.bf16.msra.mxu0 0
    %237 = vmatprep.subr.bf16.mxu0 0
    %238 = vmatpush2.bf16.msra.mxu0 0
    %239 = vmatprep.subr.bf16.mxu0 0
    %240 = vmatpush2.bf16.msra.mxu0 0
    %241 = vmatprep.subr.bf16.mxu0 0
    %242 = vmatpush2.bf16.msra.mxu0 0
    %243 = vmatprep.subr.bf16.mxu0 0
    %244 = vmatpush2.bf16.msra.mxu0 0
    %245 = vmatprep.subr.bf16.mxu0 0
    %246 = vmatpush2.bf16.msra.mxu0 0
    %247 = vmatprep.subr.bf16.mxu0 0
    %248 = vmatpush2.bf16.msra.mxu0 0
    %249 = vmatprep.mubr.bf16.mxu0 0
    %250 = vmatmul.mubr.bf16.gmra.mxu0 %v143
    %v251 = vpop.f32.mrf.mxu0
    %v252 = vadd.f32 %v167, %v251
    %v253 = vpop.f32.mrf.mxu0
    %v254 = vpop.f32.mrf.mxu0
    %v255 = vpop.f32.mrf.mxu0
    %256 = vdwg.mxu0
    %v257 = vmax.f32 %v252, 0.0
    %v258 = vpack.c.bf16 %v257, %v257
    %s259 = scalar_lea.vmem [#allocation2], 128
    %v260 = vld [vmem:[%s259] sm:$0xf]
    %v261 = vld [vmem:[%s259 + $0x4] sm:$0xf]
    %v262 = vld [vmem:[%s259 + $0x8] sm:$0xf]
    %v263 = vld [vmem:[%s259 + $0xc] sm:$0xf]
    %v264 = vld [vmem:[%s259 + $0x10] sm:$0xf]
    %v265 = vld [vmem:[%s259 + $0x14] sm:$0xf]
    %v266 = vld [vmem:[%s259 + $0x18] sm:$0xf]
    %v267 = vld [vmem:[%s259 + $0x1c] sm:$0xf]
    %v268 = vld [vmem:[%s259 + $0x20] sm:$0xf]
    %v269 = vld [vmem:[%s259 + $0x24] sm:$0xf]
    %v270 = vld [vmem:[%s259 + $0x28] sm:$0xf]
    %v271 = vld [vmem:[%s259 + $0x2c] sm:$0xf]
    %v272 = vld [vmem:[%s259 + $0x30] sm:$0xf]
    %v273 = vld [vmem:[%s259 + $0x34] sm:$0xf]
    %v274 = vld [vmem:[%s259 + $0x38] sm:$0xf]
    %v275 = vld [vmem:[%s259 + $0x3c] sm:$0xf]
    %s276 = scalar_lea.vmem %s2, 2
    %v277 = vld [vmem:[%s276] sm:$0x1]
    %v279 = vlaneseq
    %v280 = vshrl.u32 %v279, 7
    %v281 = vsub.s32 0, %v280
    %v282 = vrot.slane %v277, %v281
    %v300 = vunpack.c.l.b16 %v260
    %v301 = vunpack.c.l.b16 %v261
    %v302 = vunpack.c.l.b16 %v262
    %v303 = vunpack.c.l.b16 %v263
    %v304 = vunpack.c.l.b16 %v264
    %v305 = vunpack.c.l.b16 %v265
    %v306 = vunpack.c.l.b16 %v266
    %v307 = vunpack.c.l.b16 %v267
    %v308 = vunpack.c.l.b16 %v268
    %v309 = vunpack.c.l.b16 %v269
    %v310 = vunpack.c.l.b16 %v270
    %v311 = vunpack.c.l.b16 %v271
    %v312 = vunpack.c.l.b16 %v272
    %v313 = vunpack.c.l.b16 %v273
    %v314 = vunpack.c.l.b16 %v274
    %v315 = vunpack.c.l.b16 %v275
    %v316 = vpack.c.b16 %v301, %v300
    %v317 = vpack.c.b16 %v303, %v302
    %v318 = vpack.c.b16 %v305, %v304
    %v319 = vpack.c.b16 %v307, %v306
    %v320 = vpack.c.b16 %v309, %v308
    %v321 = vpack.c.b16 %v311, %v310
    %v322 = vpack.c.b16 %v313, %v312
    %v323 = vpack.c.b16 %v315, %v314
    %332 = vmatprep.subr.bf16.mxu0 0
    %333 = vmatpush1.bf16.msra.mxu0 %v323
    %334 = vmatprep.subr.bf16.mxu0 0
    %335 = vmatpush1.bf16.msra.mxu0 %v322
    %336 = vmatprep.subr.bf16.mxu0 0
    %337 = vmatpush1.bf16.msra.mxu0 %v321
    %338 = vmatprep.subr.bf16.mxu0 0
    %339 = vmatpush1.bf16.msra.mxu0 %v320
    %340 = vmatprep.subr.bf16.mxu0 0
    %341 = vmatpush1.bf16.msra.mxu0 %v319
    %342 = vmatprep.subr.bf16.mxu0 0
    %343 = vmatpush1.bf16.msra.mxu0 %v318
    %344 = vmatprep.subr.bf16.mxu0 0
    %345 = vmatpush1.bf16.msra.mxu0 %v317
    %346 = vmatprep.subr.bf16.mxu0 0
    %347 = vmatpush1.bf16.msra.mxu0 %v316
    %348 = vmatprep.subr.bf16.mxu0 0
    %349 = vmatpush2.bf16.msra.mxu0 0
    %350 = vmatprep.subr.bf16.mxu0 0
    %351 = vmatpush2.bf16.msra.mxu0 0
    %352 = vmatprep.subr.bf16.mxu0 0
    %353 = vmatpush2.bf16.msra.mxu0 0
    %354 = vmatprep.subr.bf16.mxu0 0
    %355 = vmatpush2.bf16.msra.mxu0 0
    %356 = vmatprep.subr.bf16.mxu0 0
    %357 = vmatpush2.bf16.msra.mxu0 0
    %358 = vmatprep.subr.bf16.mxu0 0
    %359 = vmatpush2.bf16.msra.mxu0 0
    %360 = vmatprep.subr.bf16.mxu0 0
    %361 = vmatpush2.bf16.msra.mxu0 0
    %362 = vmatprep.subr.bf16.mxu0 0
    %363 = vmatpush2.bf16.msra.mxu0 0
    %364 = vmatprep.mubr.bf16.mxu0 0
    %365 = vmatmul.mubr.bf16.gmra.mxu0 %v258
    %v366 = vpop.f32.mrf.mxu0
    %v367 = vadd.f32 %v282, %v366
    %v368 = vpop.f32.mrf.mxu0
    %v369 = vpop.f32.mrf.mxu0
    %v370 = vpop.f32.mrf.mxu0
    %371 = vdwg.mxu0
    %v372 = vmax.f32 %v367, 0.0
    %v373 = vpack.c.bf16 %v372, %v372
    %s374 = scalar_lea.vmem [#allocation2], 192
    %v375 = vld [vmem:[%s374] sm:$0xf]
    %v376 = vld [vmem:[%s374 + $0x4] sm:$0xf]
    %v377 = vld [vmem:[%s374 + $0x8] sm:$0xf]
    %v378 = vld [vmem:[%s374 + $0xc] sm:$0xf]
    %v379 = vld [vmem:[%s374 + $0x10] sm:$0xf]
    %v380 = vld [vmem:[%s374 + $0x14] sm:$0xf]
    %v381 = vld [vmem:[%s374 + $0x18] sm:$0xf]
    %v382 = vld [vmem:[%s374 + $0x1c] sm:$0xf]
    %v383 = vld [vmem:[%s374 + $0x20] sm:$0xf]
    %v384 = vld [vmem:[%s374 + $0x24] sm:$0xf]
    %v385 = vld [vmem:[%s374 + $0x28] sm:$0xf]
    %v386 = vld [vmem:[%s374 + $0x2c] sm:$0xf]
    %v387 = vld [vmem:[%s374 + $0x30] sm:$0xf]
    %v388 = vld [vmem:[%s374 + $0x34] sm:$0xf]
    %v389 = vld [vmem:[%s374 + $0x38] sm:$0xf]
    %v390 = vld [vmem:[%s374 + $0x3c] sm:$0xf]
    %s391 = scalar_lea.vmem %s2, 3
    %v392 = vld [vmem:[%s391] sm:$0x1]
    %v394 = vlaneseq
    %v395 = vshrl.u32 %v394, 7
    %v396 = vsub.s32 0, %v395
    %v397 = vrot.slane %v392, %v396
    %v415 = vunpack.c.l.b16 %v375
    %v416 = vunpack.c.l.b16 %v376
    %v417 = vunpack.c.l.b16 %v377
    %v418 = vunpack.c.l.b16 %v378
    %v419 = vunpack.c.l.b16 %v379
    %v420 = vunpack.c.l.b16 %v380
    %v421 = vunpack.c.l.b16 %v381
    %v422 = vunpack.c.l.b16 %v382
    %v423 = vunpack.c.l.b16 %v383
    %v424 = vunpack.c.l.b16 %v384
    %v425 = vunpack.c.l.b16 %v385
    %v426 = vunpack.c.l.b16 %v386
    %v427 = vunpack.c.l.b16 %v387
    %v428 = vunpack.c.l.b16 %v388
    %v429 = vunpack.c.l.b16 %v389
    %v430 = vunpack.c.l.b16 %v390
    %v431 = vpack.c.b16 %v416, %v415
    %v432 = vpack.c.b16 %v418, %v417
    %v433 = vpack.c.b16 %v420, %v419
    %v434 = vpack.c.b16 %v422, %v421
    %v435 = vpack.c.b16 %v424, %v423
    %v436 = vpack.c.b16 %v426, %v425
    %v437 = vpack.c.b16 %v428, %v427
    %v438 = vpack.c.b16 %v430, %v429
    %447 = vmatprep.subr.bf16.mxu0 0
    %448 = vmatpush1.bf16.msra.mxu0 %v438
    %449 = vmatprep.subr.bf16.mxu0 0
    %450 = vmatpush1.bf16.msra.mxu0 %v437
    %451 = vmatprep.subr.bf16.mxu0 0
    %452 = vmatpush1.bf16.msra.mxu0 %v436
    %453 = vmatprep.subr.bf16.mxu0 0
    %454 = vmatpush1.bf16.msra.mxu0 %v435
    %455 = vmatprep.subr.bf16.mxu0 0
    %456 = vmatpush1.bf16.msra.mxu0 %v434
    %457 = vmatprep.subr.bf16.mxu0 0
    %458 = vmatpush1.bf16.msra.mxu0 %v433
    %459 = vmatprep.subr.bf16.mxu0 0
    %460 = vmatpush1.bf16.msra.mxu0 %v432
    %461 = vmatprep.subr.bf16.mxu0 0
    %462 = vmatpush1.bf16.msra.mxu0 %v431
    %463 = vmatprep.subr.bf16.mxu0 0
    %464 = vmatpush2.bf16.msra.mxu0 0
    %465 = vmatprep.subr.bf16.mxu0 0
    %466 = vmatpush2.bf16.msra.mxu0 0
    %467 = vmatprep.subr.bf16.mxu0 0
    %468 = vmatpush2.bf16.msra.mxu0 0
    %469 = vmatprep.subr.bf16.mxu0 0
    %470 = vmatpush2.bf16.msra.mxu0 0
    %471 = vmatprep.subr.bf16.mxu0 0
    %472 = vmatpush2.bf16.msra.mxu0 0
    %473 = vmatprep.subr.bf16.mxu0 0
    %474 = vmatpush2.bf16.msra.mxu0 0
    %475 = vmatprep.subr.bf16.mxu0 0
    %476 = vmatpush2.bf16.msra.mxu0 0
    %477 = vmatprep.subr.bf16.mxu0 0
    %478 = vmatpush2.bf16.msra.mxu0 0
    %479 = vmatprep.mubr.bf16.mxu0 0
    %480 = vmatmul.mubr.bf16.gmra.mxu0 %v373
    %v481 = vpop.f32.mrf.mxu0
    %v482 = vadd.f32 %v397, %v481
    %v483 = vpop.f32.mrf.mxu0
    %v484 = vpop.f32.mrf.mxu0
    %v485 = vpop.f32.mrf.mxu0
    %486 = vdwg.mxu0
    %v487 = vmax.f32 %v482, 0.0
    %v488 = vpack.c.bf16 %v487, %v487
    %s489 = scalar_lea.vmem [#allocation2], 256
    %v490 = vld [vmem:[%s489] sm:$0xf]
    %v491 = vld [vmem:[%s489 + $0x4] sm:$0xf]
    %v492 = vld [vmem:[%s489 + $0x8] sm:$0xf]
    %v493 = vld [vmem:[%s489 + $0xc] sm:$0xf]
    %v494 = vld [vmem:[%s489 + $0x10] sm:$0xf]
    %v495 = vld [vmem:[%s489 + $0x14] sm:$0xf]
    %v496 = vld [vmem:[%s489 + $0x18] sm:$0xf]
    %v497 = vld [vmem:[%s489 + $0x1c] sm:$0xf]
    %v498 = vld [vmem:[%s489 + $0x20] sm:$0xf]
    %v499 = vld [vmem:[%s489 + $0x24] sm:$0xf]
    %v500 = vld [vmem:[%s489 + $0x28] sm:$0xf]
    %v501 = vld [vmem:[%s489 + $0x2c] sm:$0xf]
    %v502 = vld [vmem:[%s489 + $0x30] sm:$0xf]
    %v503 = vld [vmem:[%s489 + $0x34] sm:$0xf]
    %v504 = vld [vmem:[%s489 + $0x38] sm:$0xf]
    %v505 = vld [vmem:[%s489 + $0x3c] sm:$0xf]
    %s506 = scalar_lea.vmem %s2, 4
    %v507 = vld [vmem:[%s506] sm:$0x1]
    %v509 = vlaneseq
    %v510 = vshrl.u32 %v509, 7
    %v511 = vsub.s32 0, %v510
    %v512 = vrot.slane %v507, %v511
    %v530 = vunpack.c.l.b16 %v490
    %v531 = vunpack.c.l.b16 %v491
    %v532 = vunpack.c.l.b16 %v492
    %v533 = vunpack.c.l.b16 %v493
    %v534 = vunpack.c.l.b16 %v494
    %v535 = vunpack.c.l.b16 %v495
    %v536 = vunpack.c.l.b16 %v496
    %v537 = vunpack.c.l.b16 %v497
    %v538 = vunpack.c.l.b16 %v498
    %v539 = vunpack.c.l.b16 %v499
    %v540 = vunpack.c.l.b16 %v500
    %v541 = vunpack.c.l.b16 %v501
    %v542 = vunpack.c.l.b16 %v502
    %v543 = vunpack.c.l.b16 %v503
    %v544 = vunpack.c.l.b16 %v504
    %v545 = vunpack.c.l.b16 %v505
    %v546 = vpack.c.b16 %v531, %v530
    %v547 = vpack.c.b16 %v533, %v532
    %v548 = vpack.c.b16 %v535, %v534
    %v549 = vpack.c.b16 %v537, %v536
    %v550 = vpack.c.b16 %v539, %v538
    %v551 = vpack.c.b16 %v541, %v540
    %v552 = vpack.c.b16 %v543, %v542
    %v553 = vpack.c.b16 %v545, %v544
    %562 = vmatprep.subr.bf16.mxu0 0
    %563 = vmatpush1.bf16.msra.mxu0 %v553
    %564 = vmatprep.subr.bf16.mxu0 0
    %565 = vmatpush1.bf16.msra.mxu0 %v552
    %566 = vmatprep.subr.bf16.mxu0 0
    %567 = vmatpush1.bf16.msra.mxu0 %v551
    %568 = vmatprep.subr.bf16.mxu0 0
    %569 = vmatpush1.bf16.msra.mxu0 %v550
    %570 = vmatprep.subr.bf16.mxu0 0
    %571 = vmatpush1.bf16.msra.mxu0 %v549
    %572 = vmatprep.subr.bf16.mxu0 0
    %573 = vmatpush1.bf16.msra.mxu0 %v548
    %574 = vmatprep.subr.bf16.mxu0 0
    %575 = vmatpush1.bf16.msra.mxu0 %v547
    %576 = vmatprep.subr.bf16.mxu0 0
    %577 = vmatpush1.bf16.msra.mxu0 %v546
    %578 = vmatprep.subr.bf16.mxu0 0
    %579 = vmatpush2.bf16.msra.mxu0 0
    %580 = vmatprep.subr.bf16.mxu0 0
    %581 = vmatpush2.bf16.msra.mxu0 0
    %582 = vmatprep.subr.bf16.mxu0 0
    %583 = vmatpush2.bf16.msra.mxu0 0
    %584 = vmatprep.subr.bf16.mxu0 0
    %585 = vmatpush2.bf16.msra.mxu0 0
    %586 = vmatprep.subr.bf16.mxu0 0
    %587 = vmatpush2.bf16.msra.mxu0 0
    %588 = vmatprep.subr.bf16.mxu0 0
    %589 = vmatpush2.bf16.msra.mxu0 0
    %590 = vmatprep.subr.bf16.mxu0 0
    %591 = vmatpush2.bf16.msra.mxu0 0
    %592 = vmatprep.subr.bf16.mxu0 0
    %593 = vmatpush2.bf16.msra.mxu0 0
    %594 = vmatprep.mubr.bf16.mxu0 0
    %595 = vmatmul.mubr.bf16.gmra.mxu0 %v488
    %v596 = vpop.f32.mrf.mxu0
    %v597 = vadd.f32 %v512, %v596
    %v598 = vpop.f32.mrf.mxu0
    %v599 = vpop.f32.mrf.mxu0
    %v600 = vpop.f32.mrf.mxu0
    %601 = vdwg.mxu0
    %v602 = vmax.f32 %v597, 0.0
    %v603 = vpack.c.bf16 %v602, %v602
    %s604 = scalar_lea.vmem [#allocation2], 320
    %v605 = vld [vmem:[%s604] sm:$0xf]
    %v606 = vld [vmem:[%s604 + $0x4] sm:$0xf]
    %v607 = vld [vmem:[%s604 + $0x8] sm:$0xf]
    %v608 = vld [vmem:[%s604 + $0xc] sm:$0xf]
    %v609 = vld [vmem:[%s604 + $0x10] sm:$0xf]
    %v610 = vld [vmem:[%s604 + $0x14] sm:$0xf]
    %v611 = vld [vmem:[%s604 + $0x18] sm:$0xf]
    %v612 = vld [vmem:[%s604 + $0x1c] sm:$0xf]
    %v613 = vld [vmem:[%s604 + $0x20] sm:$0xf]
    %v614 = vld [vmem:[%s604 + $0x24] sm:$0xf]
    %v615 = vld [vmem:[%s604 + $0x28] sm:$0xf]
    %v616 = vld [vmem:[%s604 + $0x2c] sm:$0xf]
    %v617 = vld [vmem:[%s604 + $0x30] sm:$0xf]
    %v618 = vld [vmem:[%s604 + $0x34] sm:$0xf]
    %v619 = vld [vmem:[%s604 + $0x38] sm:$0xf]
    %v620 = vld [vmem:[%s604 + $0x3c] sm:$0xf]
    %s621 = scalar_lea.vmem %s2, 5
    %v622 = vld [vmem:[%s621] sm:$0x1]
    %v624 = vlaneseq
    %v625 = vshrl.u32 %v624, 7
    %v626 = vsub.s32 0, %v625
    %v627 = vrot.slane %v622, %v626
    %v645 = vunpack.c.l.b16 %v605
    %v646 = vunpack.c.l.b16 %v606
    %v647 = vunpack.c.l.b16 %v607
    %v648 = vunpack.c.l.b16 %v608
    %v649 = vunpack.c.l.b16 %v609
    %v650 = vunpack.c.l.b16 %v610
    %v651 = vunpack.c.l.b16 %v611
    %v652 = vunpack.c.l.b16 %v612
    %v653 = vunpack.c.l.b16 %v613
    %v654 = vunpack.c.l.b16 %v614
    %v655 = vunpack.c.l.b16 %v615
    %v656 = vunpack.c.l.b16 %v616
    %v657 = vunpack.c.l.b16 %v617
    %v658 = vunpack.c.l.b16 %v618
    %v659 = vunpack.c.l.b16 %v619
    %v660 = vunpack.c.l.b16 %v620
    %v661 = vpack.c.b16 %v646, %v645
    %v662 = vpack.c.b16 %v648, %v647
    %v663 = vpack.c.b16 %v650, %v649
    %v664 = vpack.c.b16 %v652, %v651
    %v665 = vpack.c.b16 %v654, %v653
    %v666 = vpack.c.b16 %v656, %v655
    %v667 = vpack.c.b16 %v658, %v657
    %v668 = vpack.c.b16 %v660, %v659
    %677 = vmatprep.subr.bf16.mxu0 0
    %678 = vmatpush1.bf16.msra.mxu0 %v668
    %679 = vmatprep.subr.bf16.mxu0 0
    %680 = vmatpush1.bf16.msra.mxu0 %v667
    %681 = vmatprep.subr.bf16.mxu0 0
    %682 = vmatpush1.bf16.msra.mxu0 %v666
    %683 = vmatprep.subr.bf16.mxu0 0
    %684 = vmatpush1.bf16.msra.mxu0 %v665
    %685 = vmatprep.subr.bf16.mxu0 0
    %686 = vmatpush1.bf16.msra.mxu0 %v664
    %687 = vmatprep.subr.bf16.mxu0 0
    %688 = vmatpush1.bf16.msra.mxu0 %v663
    %689 = vmatprep.subr.bf16.mxu0 0
    %690 = vmatpush1.bf16.msra.mxu0 %v662
    %691 = vmatprep.subr.bf16.mxu0 0
    %692 = vmatpush1.bf16.msra.mxu0 %v661
    %693 = vmatprep.subr.bf16.mxu0 0
    %694 = vmatpush2.bf16.msra.mxu0 0
    %695 = vmatprep.subr.bf16.mxu0 0
    %696 = vmatpush2.bf16.msra.mxu0 0
    %697 = vmatprep.subr.bf16.mxu0 0
    %698 = vmatpush2.bf16.msra.mxu0 0
    %699 = vmatprep.subr.bf16.mxu0 0
    %700 = vmatpush2.bf16.msra.mxu0 0
    %701 = vmatprep.subr.bf16.mxu0 0
    %702 = vmatpush2.bf16.msra.mxu0 0
    %703 = vmatprep.subr.bf16.mxu0 0
    %704 = vmatpush2.bf16.msra.mxu0 0
    %705 = vmatprep.subr.bf16.mxu0 0
    %706 = vmatpush2.bf16.msra.mxu0 0
    %707 = vmatprep.subr.bf16.mxu0 0
    %708 = vmatpush2.bf16.msra.mxu0 0
    %709 = vmatprep.mubr.bf16.mxu0 0
    %710 = vmatmul.mubr.bf16.gmra.mxu0 %v603
    %v711 = vpop.f32.mrf.mxu0
    %v712 = vadd.f32 %v627, %v711
    %v713 = vpop.f32.mrf.mxu0
    %v714 = vpop.f32.mrf.mxu0
    %v715 = vpop.f32.mrf.mxu0
    %716 = vdwg.mxu0
    %717 = vst [vmem:[#allocation5] sm:$0xff] %v712
    // Predicated region
    $region18: #{_mlp_forward.1} parent=1 // pred_check
      _
    $region19: #{_mlp_forward.1} parent=1 // pred_check_branch
      %719 = sbr.rel (0) target = $region21
    $region20: #{_mlp_forward.1} parent=1 // pred_region
      %s721 = ssub.s32 128, 128
      %722 = vsyncadd [#allocation4], %s721
      %s724 = sshll.u32 [#allocation5], 4
      %s725 = int_to_ptr.vmem [resolvable:$true] %s724
      %727 = dma.vmem_to_hbm [thread:$0]  %s725, 128, %s3, [#allocation4]
    $region21: #{_mlp_forward.1} parent=1 // pred_fallthru
      _
    // Predicated region
    $region22: #{_mlp_forward.1} parent=1 // pred_check
      _
    $region23: #{_mlp_forward.1} parent=1 // pred_check_branch
      %729 = sbr.rel (0) target = $region25
    $region24: #{_mlp_forward.1} parent=1 // pred_region
      %730 = dma.done [#allocation4], 128
    $region25: #{_mlp_forward.1} parent=1 // pred_fallthru
      _
    %731 = vsyncpa [#allocation3], 1
    %732 = vsyncpa [#allocation4], 1

// kernel: _mlp_forward.1
$region0: #{_mlp_forward.1}
  #allocation0 [shape = 'u32[]', space=smem, size = 0x4, offset = 0x4, fixed_abs, tag = 'smem constant byte address 0x4 - core index']
  #allocation1 [shape = 'u32[144,128]{1,0:T(1,128)}', space=vmem, size = 0x12000, scoped, tag = 'internal scratch']
  %s0 = inlined_call_operand.vmem [shape: bf16[8,128], index: 0, kind: input, shape index: {}]
  %s1 = inlined_call_operand.hbm [shape: bf16[6,128,128], index: 1, kind: input, shape index: {}]
  %s2 = inlined_call_operand.vmem [shape: f32[6,1,128], index: 2, kind: input, shape index: {}]
  %s3 = inlined_call_operand.hbm [shape: f32[8,128], index: 3, kind: output, shape index: {}]
  %s4 = sld [smem:[#allocation0]]
  $region26: #{_mlp_forward.1} parent=0
    _
  %s6 = ssub.s32 1, %s4
  %s7 = scalar_select 0, %s6, %s4
  $region1: #{_mlp_forward.1} parent=0
    #allocation2 [shape = 'u8[196608]{0}', space=vmem, size = 0x30000, scoped, tag = 'input window, operand 1, single buffered']
    #allocation3 [shape = 's32[1]{0}', space=sflag, size = 0x4, scoped, tag = 'scoped memory for _mlp_forward.1']
    #allocation4 [shape = 's32[1]{0}', space=sflag, size = 0x4, scoped, tag = 'scoped memory for _mlp_forward.1']
    #allocation5 [shape = 'u8[4096]{0}', space=vmem, size = 0x1000, scoped, tag = 'output window, operand 0, single buffered']
    %8 = vsyncpa [#allocation3], 0
    %9 = vsyncpa [#allocation4], 0
    // Predicated region
    $region2: #{_mlp_forward.1} parent=1 // pred_check
      _
    $region3: #{_mlp_forward.1} parent=1 // pred_check_branch
      %11 = sbr.rel (0) target = $region5
    $region4: #{_mlp_forward.1} parent=1 // pred_region
      _
    $region5: #{_mlp_forward.1} parent=1 // pred_fallthru
      _
    // Predicated region
    $region6: #{_mlp_forward.1} parent=1 // pred_check
      _
    $region7: #{_mlp_forward.1} parent=1 // pred_check_branch
      %13 = sbr.rel (0) target = $region9
    $region8: #{_mlp_forward.1} parent=1 // pred_region
      %s15 = ssub.s32 6144, 6144
      %16 = vsyncadd [#allocation3], %s15
      %s17 = sshll.u32 [#allocation2], 4
      %s18 = int_to_ptr.vmem [resolvable:$true] %s17
      %23 = dma.hbm_to_vmem [thread:$0]  %s1, 6144, %s18, [#allocation3], 64, 64, 4
    $region9: #{_mlp_forward.1} parent=1 // pred_fallthru
      _
    // Predicated region
    $region10: #{_mlp_forward.1} parent=1 // pred_check
      _
    $region11: #{_mlp_forward.1} parent=1 // pred_check_branch
      %25 = sbr.rel (0) target = $region13
    $region12: #{_mlp_forward.1} parent=1 // pred_region
      _
    $region13: #{_mlp_forward.1} parent=1 // pred_fallthru
      _
    // Predicated region
    $region14: #{_mlp_forward.1} parent=1 // pred_check
      _
    $region15: #{_mlp_forward.1} parent=1 // pred_check_branch
      %27 = sbr.rel (0) target = $region17
    $region16: #{_mlp_forward.1} parent=1 // pred_region
      %28 = dma.done [#allocation3], 6144
    $region17: #{_mlp_forward.1} parent=1 // pred_fallthru
      _
    %v30 = vld [vmem:[%s0] sm:$0xf]
    %v31 = vld [vmem:[#allocation2] sm:$0xf]
    %v32 = vld [vmem:[#allocation2 + $0x4] sm:$0xf]
    %v33 = vld [vmem:[#allocation2 + $0x8] sm:$0xf]
    %v34 = vld [vmem:[#allocation2 + $0xc] sm:$0xf]
    %v35 = vld [vmem:[#allocation2 + $0x10] sm:$0xf]
    %v36 = vld [vmem:[#allocation2 + $0x14] sm:$0xf]
    %v37 = vld [vmem:[#allocation2 + $0x18] sm:$0xf]
    %v38 = vld [vmem:[#allocation2 + $0x1c] sm:$0xf]
    %v39 = vld [vmem:[#allocation2 + $0x20] sm:$0xf]
    %v40 = vld [vmem:[#allocation2 + $0x24] sm:$0xf]
    %v41 = vld [vmem:[#allocation2 + $0x28] sm:$0xf]
    %v42 = vld [vmem:[#allocation2 + $0x2c] sm:$0xf]
    %v43 = vld [vmem:[#allocation2 + $0x30] sm:$0xf]
    %v44 = vld [vmem:[#allocation2 + $0x34] sm:$0xf]
    %v45 = vld [vmem:[#allocation2 + $0x38] sm:$0xf]
    %v46 = vld [vmem:[#allocation2 + $0x3c] sm:$0xf]
    %v47 = vld [vmem:[%s2] sm:$0x1]
    %v49 = vlaneseq
    %v50 = vshrl.u32 %v49, 7
    %v51 = vsub.s32 0, %v50
    %v52 = vrot.slane %v47, %v51
    %v70 = vunpack.c.l.b16 %v31
    %v71 = vunpack.c.l.b16 %v32
    %v72 = vunpack.c.l.b16 %v33
    %v73 = vunpack.c.l.b16 %v34
    %v74 = vunpack.c.l.b16 %v35
    %v75 = vunpack.c.l.b16 %v36
    %v76 = vunpack.c.l.b16 %v37
    %v77 = vunpack.c.l.b16 %v38
    %v78 = vunpack.c.l.b16 %v39
    %v79 = vunpack.c.l.b16 %v40
    %v80 = vunpack.c.l.b16 %v41
    %v81 = vunpack.c.l.b16 %v42
    %v82 = vunpack.c.l.b16 %v43
    %v83 = vunpack.c.l.b16 %v44
    %v84 = vunpack.c.l.b16 %v45
    %v85 = vunpack.c.l.b16 %v46
    %v86 = vpack.c.b16 %v71, %v70
    %v87 = vpack.c.b16 %v73, %v72
    %v88 = vpack.c.b16 %v75, %v74
    %v89 = vpack.c.b16 %v77, %v76
    %v90 = vpack.c.b16 %v79, %v78
    %v91 = vpack.c.b16 %v81, %v80
    %v92 = vpack.c.b16 %v83, %v82
    %v93 = vpack.c.b16 %v85, %v84
    %102 = vmatprep.subr.bf16.mxu0 0
    %103 = vmatpush1.bf16.msra.mxu0 %v93
    %104 = vmatprep.subr.bf16.mxu0 0
    %105 = vmatpush1.bf16.msra.mxu0 %v92
    %106 = vmatprep.subr.bf16.mxu0 0
    %107 = vmatpush1.bf16.msra.mxu0 %v91
    %108 = vmatprep.subr.bf16.mxu0 0
    %109 = vmatpush1.bf16.msra.mxu0 %v90
    %110 = vmatprep.subr.bf16.mxu0 0
    %111 = vmatpush1.bf16.msra.mxu0 %v89
    %112 = vmatprep.subr.bf16.mxu0 0
    %113 = vmatpush1.bf16.msra.mxu0 %v88
    %114 = vmatprep.subr.bf16.mxu0 0
    %115 = vmatpush1.bf16.msra.mxu0 %v87
    %116 = vmatprep.subr.bf16.mxu0 0
    %117 = vmatpush1.bf16.msra.mxu0 %v86
    %118 = vmatprep.subr.bf16.mxu0 0
    %119 = vmatpush2.bf16.msra.mxu0 0
    %120 = vmatprep.subr.bf16.mxu0 0
    %121 = vmatpush2.bf16.msra.mxu0 0
    %122 = vmatprep.subr.bf16.mxu0 0
    %123 = vmatpush2.bf16.msra.mxu0 0
    %124 = vmatprep.subr.bf16.mxu0 0
    %125 = vmatpush2.bf16.msra.mxu0 0
    %126 = vmatprep.subr.bf16.mxu0 0
    %127 = vmatpush2.bf16.msra.mxu0 0
    %128 = vmatprep.subr.bf16.mxu0 0
    %129 = vmatpush2.bf16.msra.mxu0 0
    %130 = vmatprep.subr.bf16.mxu0 0
    %131 = vmatpush2.bf16.msra.mxu0 0
    %132 = vmatprep.subr.bf16.mxu0 0
    %133 = vmatpush2.bf16.msra.mxu0 0
    %134 = vmatprep.mubr.bf16.mxu0 0
    %135 = vmatmul.mubr.bf16.gmra.mxu0 %v30
    %v136 = vpop.f32.mrf.mxu0
    %v137 = vadd.f32 %v52, %v136
    %v138 = vpop.f32.mrf.mxu0
    %v139 = vpop.f32.mrf.mxu0
    %v140 = vpop.f32.mrf.mxu0
    %141 = vdwg.mxu0
    %v142 = vmax.f32 %v137, 0.0
    %v143 = vpack.c.bf16 %v142, %v142
    %s144 = scalar_lea.vmem [#allocation2], 64
    %v145 = vld [vmem:[%s144] sm:$0xf]
    %v146 = vld [vmem:[%s144 + $0x4] sm:$0xf]
    %v147 = vld [vmem:[%s144 + $0x8] sm:$0xf]
    %v148 = vld [vmem:[%s144 + $0xc] sm:$0xf]
    %v149 = vld [vmem:[%s144 + $0x10] sm:$0xf]
    %v150 = vld [vmem:[%s144 + $0x14] sm:$0xf]
    %v151 = vld [vmem:[%s144 + $0x18] sm:$0xf]
    %v152 = vld [vmem:[%s144 + $0x1c] sm:$0xf]
    %v153 = vld [vmem:[%s144 + $0x20] sm:$0xf]
    %v154 = vld [vmem:[%s144 + $0x24] sm:$0xf]
    %v155 = vld [vmem:[%s144 + $0x28] sm:$0xf]
    %v156 = vld [vmem:[%s144 + $0x2c] sm:$0xf]
    %v157 = vld [vmem:[%s144 + $0x30] sm:$0xf]
    %v158 = vld [vmem:[%s144 + $0x34] sm:$0xf]
    %v159 = vld [vmem:[%s144 + $0x38] sm:$0xf]
    %v160 = vld [vmem:[%s144 + $0x3c] sm:$0xf]
    %s161 = scalar_lea.vmem %s2, 1
    %v162 = vld [vmem:[%s161] sm:$0x1]
    %v164 = vlaneseq
    %v165 = vshrl.u32 %v164, 7
    %v166 = vsub.s32 0, %v165
    %v167 = vrot.slane %v162, %v166
    %v185 = vunpack.c.l.b16 %v145
    %v186 = vunpack.c.l.b16 %v146
    %v187 = vunpack.c.l.b16 %v147
    %v188 = vunpack.c.l.b16 %v148
    %v189 = vunpack.c.l.b16 %v149
    %v190 = vunpack.c.l.b16 %v150
    %v191 = vunpack.c.l.b16 %v151
    %v192 = vunpack.c.l.b16 %v152
    %v193 = vunpack.c.l.b16 %v153
    %v194 = vunpack.c.l.b16 %v154
    %v195 = vunpack.c.l.b16 %v155
    %v196 = vunpack.c.l.b16 %v156
    %v197 = vunpack.c.l.b16 %v157
    %v198 = vunpack.c.l.b16 %v158
    %v199 = vunpack.c.l.b16 %v159
    %v200 = vunpack.c.l.b16 %v160
    %v201 = vpack.c.b16 %v186, %v185
    %v202 = vpack.c.b16 %v188, %v187
    %v203 = vpack.c.b16 %v190, %v189
    %v204 = vpack.c.b16 %v192, %v191
    %v205 = vpack.c.b16 %v194, %v193
    %v206 = vpack.c.b16 %v196, %v195
    %v207 = vpack.c.b16 %v198, %v197
    %v208 = vpack.c.b16 %v200, %v199
    %217 = vmatprep.subr.bf16.mxu0 0
    %218 = vmatpush1.bf16.msra.mxu0 %v208
    %219 = vmatprep.subr.bf16.mxu0 0
    %220 = vmatpush1.bf16.msra.mxu0 %v207
    %221 = vmatprep.subr.bf16.mxu0 0
    %222 = vmatpush1.bf16.msra.mxu0 %v206
    %223 = vmatprep.subr.bf16.mxu0 0
    %224 = vmatpush1.bf16.msra.mxu0 %v205
    %225 = vmatprep.subr.bf16.mxu0 0
    %226 = vmatpush1.bf16.msra.mxu0 %v204
    %227 = vmatprep.subr.bf16.mxu0 0
    %228 = vmatpush1.bf16.msra.mxu0 %v203
    %229 = vmatprep.subr.bf16.mxu0 0
    %230 = vmatpush1.bf16.msra.mxu0 %v202
    %231 = vmatprep.subr.bf16.mxu0 0
    %232 = vmatpush1.bf16.msra.mxu0 %v201
    %233 = vmatprep.subr.bf16.mxu0 0
    %234 = vmatpush2.bf16.msra.mxu0 0
    %235 = vmatprep.subr.bf16.mxu0 0
    %236 = vmatpush2.bf16.msra.mxu0 0
    %237 = vmatprep.subr.bf16.mxu0 0
    %238 = vmatpush2.bf16.msra.mxu0 0
    %239 = vmatprep.subr.bf16.mxu0 0
    %240 = vmatpush2.bf16.msra.mxu0 0
    %241 = vmatprep.subr.bf16.mxu0 0
    %242 = vmatpush2.bf16.msra.mxu0 0
    %243 = vmatprep.subr.bf16.mxu0 0
    %244 = vmatpush2.bf16.msra.mxu0 0
    %245 = vmatprep.subr.bf16.mxu0 0
    %246 = vmatpush2.bf16.msra.mxu0 0
    %247 = vmatprep.subr.bf16.mxu0 0
    %248 = vmatpush2.bf16.msra.mxu0 0
    %249 = vmatprep.mubr.bf16.mxu0 0
    %250 = vmatmul.mubr.bf16.gmra.mxu0 %v143
    %v251 = vpop.f32.mrf.mxu0
    %v252 = vadd.f32 %v167, %v251
    %v253 = vpop.f32.mrf.mxu0
    %v254 = vpop.f32.mrf.mxu0
    %v255 = vpop.f32.mrf.mxu0
    %256 = vdwg.mxu0
    %v257 = vmax.f32 %v252, 0.0
    %v258 = vpack.c.bf16 %v257, %v257
    %s259 = scalar_lea.vmem [#allocation2], 128
    %v260 = vld [vmem:[%s259] sm:$0xf]
    %v261 = vld [vmem:[%s259 + $0x4] sm:$0xf]
    %v262 = vld [vmem:[%s259 + $0x8] sm:$0xf]
    %v263 = vld [vmem:[%s259 + $0xc] sm:$0xf]
    %v264 = vld [vmem:[%s259 + $0x10] sm:$0xf]
    %v265 = vld [vmem:[%s259 + $0x14] sm:$0xf]
    %v266 = vld [vmem:[%s259 + $0x18] sm:$0xf]
    %v267 = vld [vmem:[%s259 + $0x1c] sm:$0xf]
    %v268 = vld [vmem:[%s259 + $0x20] sm:$0xf]
    %v269 = vld [vmem:[%s259 + $0x24] sm:$0xf]
    %v270 = vld [vmem:[%s259 + $0x28] sm:$0xf]
    %v271 = vld [vmem:[%s259 + $0x2c] sm:$0xf]
    %v272 = vld [vmem:[%s259 + $0x30] sm:$0xf]
    %v273 = vld [vmem:[%s259 + $0x34] sm:$0xf]
    %v274 = vld [vmem:[%s259 + $0x38] sm:$0xf]
    %v275 = vld [vmem:[%s259 + $0x3c] sm:$0xf]
    %s276 = scalar_lea.vmem %s2, 2
    %v277 = vld [vmem:[%s276] sm:$0x1]
    %v279 = vlaneseq
    %v280 = vshrl.u32 %v279, 7
    %v281 = vsub.s32 0, %v280
    %v282 = vrot.slane %v277, %v281
    %v300 = vunpack.c.l.b16 %v260
    %v301 = vunpack.c.l.b16 %v261
    %v302 = vunpack.c.l.b16 %v262
    %v303 = vunpack.c.l.b16 %v263
    %v304 = vunpack.c.l.b16 %v264
    %v305 = vunpack.c.l.b16 %v265
    %v306 = vunpack.c.l.b16 %v266
    %v307 = vunpack.c.l.b16 %v267
    %v308 = vunpack.c.l.b16 %v268
    %v309 = vunpack.c.l.b16 %v269
    %v310 = vunpack.c.l.b16 %v270
    %v311 = vunpack.c.l.b16 %v271
    %v312 = vunpack.c.l.b16 %v272
    %v313 = vunpack.c.l.b16 %v273
    %v314 = vunpack.c.l.b16 %v274
    %v315 = vunpack.c.l.b16 %v275
    %v316 = vpack.c.b16 %v301, %v300
    %v317 = vpack.c.b16 %v303, %v302
    %v318 = vpack.c.b16 %v305, %v304
    %v319 = vpack.c.b16 %v307, %v306
    %v320 = vpack.c.b16 %v309, %v308
    %v321 = vpack.c.b16 %v311, %v310
    %v322 = vpack.c.b16 %v313, %v312
    %v323 = vpack.c.b16 %v315, %v314
    %332 = vmatprep.subr.bf16.mxu0 0
    %333 = vmatpush1.bf16.msra.mxu0 %v323
    %334 = vmatprep.subr.bf16.mxu0 0
    %335 = vmatpush1.bf16.msra.mxu0 %v322
    %336 = vmatprep.subr.bf16.mxu0 0
    %337 = vmatpush1.bf16.msra.mxu0 %v321
    %338 = vmatprep.subr.bf16.mxu0 0
    %339 = vmatpush1.bf16.msra.mxu0 %v320
    %340 = vmatprep.subr.bf16.mxu0 0
    %341 = vmatpush1.bf16.msra.mxu0 %v319
    %342 = vmatprep.subr.bf16.mxu0 0
    %343 = vmatpush1.bf16.msra.mxu0 %v318
    %344 = vmatprep.subr.bf16.mxu0 0
    %345 = vmatpush1.bf16.msra.mxu0 %v317
    %346 = vmatprep.subr.bf16.mxu0 0
    %347 = vmatpush1.bf16.msra.mxu0 %v316
    %348 = vmatprep.subr.bf16.mxu0 0
    %349 = vmatpush2.bf16.msra.mxu0 0
    %350 = vmatprep.subr.bf16.mxu0 0
    %351 = vmatpush2.bf16.msra.mxu0 0
    %352 = vmatprep.subr.bf16.mxu0 0
    %353 = vmatpush2.bf16.msra.mxu0 0
    %354 = vmatprep.subr.bf16.mxu0 0
    %355 = vmatpush2.bf16.msra.mxu0 0
    %356 = vmatprep.subr.bf16.mxu0 0
    %357 = vmatpush2.bf16.msra.mxu0 0
    %358 = vmatprep.subr.bf16.mxu0 0
    %359 = vmatpush2.bf16.msra.mxu0 0
    %360 = vmatprep.subr.bf16.mxu0 0
    %361 = vmatpush2.bf16.msra.mxu0 0
    %362 = vmatprep.subr.bf16.mxu0 0
    %363 = vmatpush2.bf16.msra.mxu0 0
    %364 = vmatprep.mubr.bf16.mxu0 0
    %365 = vmatmul.mubr.bf16.gmra.mxu0 %v258
    %v366 = vpop.f32.mrf.mxu0
    %v367 = vadd.f32 %v282, %v366
    %v368 = vpop.f32.mrf.mxu0
    %v369 = vpop.f32.mrf.mxu0
    %v370 = vpop.f32.mrf.mxu0
    %371 = vdwg.mxu0
    %v372 = vmax.f32 %v367, 0.0
    %v373 = vpack.c.bf16 %v372, %v372
    %s374 = scalar_lea.vmem [#allocation2], 192
    %v375 = vld [vmem:[%s374] sm:$0xf]
    %v376 = vld [vmem:[%s374 + $0x4] sm:$0xf]
    %v377 = vld [vmem:[%s374 + $0x8] sm:$0xf]
    %v378 = vld [vmem:[%s374 + $0xc] sm:$0xf]
    %v379 = vld [vmem:[%s374 + $0x10] sm:$0xf]
    %v380 = vld [vmem:[%s374 + $0x14] sm:$0xf]
    %v381 = vld [vmem:[%s374 + $0x18] sm:$0xf]
    %v382 = vld [vmem:[%s374 + $0x1c] sm:$0xf]
    %v383 = vld [vmem:[%s374 + $0x20] sm:$0xf]
    %v384 = vld [vmem:[%s374 + $0x24] sm:$0xf]
    %v385 = vld [vmem:[%s374 + $0x28] sm:$0xf]
    %v386 = vld [vmem:[%s374 + $0x2c] sm:$0xf]
    %v387 = vld [vmem:[%s374 + $0x30] sm:$0xf]
    %v388 = vld [vmem:[%s374 + $0x34] sm:$0xf]
    %v389 = vld [vmem:[%s374 + $0x38] sm:$0xf]
    %v390 = vld [vmem:[%s374 + $0x3c] sm:$0xf]
    %s391 = scalar_lea.vmem %s2, 3
    %v392 = vld [vmem:[%s391] sm:$0x1]
    %v394 = vlaneseq
    %v395 = vshrl.u32 %v394, 7
    %v396 = vsub.s32 0, %v395
    %v397 = vrot.slane %v392, %v396
    %v415 = vunpack.c.l.b16 %v375
    %v416 = vunpack.c.l.b16 %v376
    %v417 = vunpack.c.l.b16 %v377
    %v418 = vunpack.c.l.b16 %v378
    %v419 = vunpack.c.l.b16 %v379
    %v420 = vunpack.c.l.b16 %v380
    %v421 = vunpack.c.l.b16 %v381
    %v422 = vunpack.c.l.b16 %v382
    %v423 = vunpack.c.l.b16 %v383
    %v424 = vunpack.c.l.b16 %v384
    %v425 = vunpack.c.l.b16 %v385
    %v426 = vunpack.c.l.b16 %v386
    %v427 = vunpack.c.l.b16 %v387
    %v428 = vunpack.c.l.b16 %v388
    %v429 = vunpack.c.l.b16 %v389
    %v430 = vunpack.c.l.b16 %v390
    %v431 = vpack.c.b16 %v416, %v415
    %v432 = vpack.c.b16 %v418, %v417
    %v433 = vpack.c.b16 %v420, %v419
    %v434 = vpack.c.b16 %v422, %v421
    %v435 = vpack.c.b16 %v424, %v423
    %v436 = vpack.c.b16 %v426, %v425
    %v437 = vpack.c.b16 %v428, %v427
    %v438 = vpack.c.b16 %v430, %v429
    %447 = vmatprep.subr.bf16.mxu0 0
    %448 = vmatpush1.bf16.msra.mxu0 %v438
    %449 = vmatprep.subr.bf16.mxu0 0
    %450 = vmatpush1.bf16.msra.mxu0 %v437
    %451 = vmatprep.subr.bf16.mxu0 0
    %452 = vmatpush1.bf16.msra.mxu0 %v436
    %453 = vmatprep.subr.bf16.mxu0 0
    %454 = vmatpush1.bf16.msra.mxu0 %v435
    %455 = vmatprep.subr.bf16.mxu0 0
    %456 = vmatpush1.bf16.msra.mxu0 %v434
    %457 = vmatprep.subr.bf16.mxu0 0
    %458 = vmatpush1.bf16.msra.mxu0 %v433
    %459 = vmatprep.subr.bf16.mxu0 0
    %460 = vmatpush1.bf16.msra.mxu0 %v432
    %461 = vmatprep.subr.bf16.mxu0 0
    %462 = vmatpush1.bf16.msra.mxu0 %v431
    %463 = vmatprep.subr.bf16.mxu0 0
    %464 = vmatpush2.bf16.msra.mxu0 0
    %465 = vmatprep.subr.bf16.mxu0 0
    %466 = vmatpush2.bf16.msra.mxu0 0
    %467 = vmatprep.subr.bf16.mxu0 0
    %468 = vmatpush2.bf16.msra.mxu0 0
    %469 = vmatprep.subr.bf16.mxu0 0
    %470 = vmatpush2.bf16.msra.mxu0 0
    %471 = vmatprep.subr.bf16.mxu0 0
    %472 = vmatpush2.bf16.msra.mxu0 0
    %473 = vmatprep.subr.bf16.mxu0 0
    %474 = vmatpush2.bf16.msra.mxu0 0
    %475 = vmatprep.subr.bf16.mxu0 0
    %476 = vmatpush2.bf16.msra.mxu0 0
    %477 = vmatprep.subr.bf16.mxu0 0
    %478 = vmatpush2.bf16.msra.mxu0 0
    %479 = vmatprep.mubr.bf16.mxu0 0
    %480 = vmatmul.mubr.bf16.gmra.mxu0 %v373
    %v481 = vpop.f32.mrf.mxu0
    %v482 = vadd.f32 %v397, %v481
    %v483 = vpop.f32.mrf.mxu0
    %v484 = vpop.f32.mrf.mxu0
    %v485 = vpop.f32.mrf.mxu0
    %486 = vdwg.mxu0
    %v487 = vmax.f32 %v482, 0.0
    %v488 = vpack.c.bf16 %v487, %v487
    %s489 = scalar_lea.vmem [#allocation2], 256
    %v490 = vld [vmem:[%s489] sm:$0xf]
    %v491 = vld [vmem:[%s489 + $0x4] sm:$0xf]
    %v492 = vld [vmem:[%s489 + $0x8] sm:$0xf]
    %v493 = vld [vmem:[%s489 + $0xc] sm:$0xf]
    %v494 = vld [vmem:[%s489 + $0x10] sm:$0xf]
    %v495 = vld [vmem:[%s489 + $0x14] sm:$0xf]
    %v496 = vld [vmem:[%s489 + $0x18] sm:$0xf]
    %v497 = vld [vmem:[%s489 + $0x1c] sm:$0xf]
    %v498 = vld [vmem:[%s489 + $0x20] sm:$0xf]
    %v499 = vld [vmem:[%s489 + $0x24] sm:$0xf]
    %v500 = vld [vmem:[%s489 + $0x28] sm:$0xf]
    %v501 = vld [vmem:[%s489 + $0x2c] sm:$0xf]
    %v502 = vld [vmem:[%s489 + $0x30] sm:$0xf]
    %v503 = vld [vmem:[%s489 + $0x34] sm:$0xf]
    %v504 = vld [vmem:[%s489 + $0x38] sm:$0xf]
    %v505 = vld [vmem:[%s489 + $0x3c] sm:$0xf]
    %s506 = scalar_lea.vmem %s2, 4
    %v507 = vld [vmem:[%s506] sm:$0x1]
    %v509 = vlaneseq
    %v510 = vshrl.u32 %v509, 7
    %v511 = vsub.s32 0, %v510
    %v512 = vrot.slane %v507, %v511
    %v530 = vunpack.c.l.b16 %v490
    %v531 = vunpack.c.l.b16 %v491
    %v532 = vunpack.c.l.b16 %v492
    %v533 = vunpack.c.l.b16 %v493
    %v534 = vunpack.c.l.b16 %v494
    %v535 = vunpack.c.l.b16 %v495
    %v536 = vunpack.c.l.b16 %v496
    %v537 = vunpack.c.l.b16 %v497
    %v538 = vunpack.c.l.b16 %v498
    %v539 = vunpack.c.l.b16 %v499
    %v540 = vunpack.c.l.b16 %v500
    %v541 = vunpack.c.l.b16 %v501
    %v542 = vunpack.c.l.b16 %v502
    %v543 = vunpack.c.l.b16 %v503
    %v544 = vunpack.c.l.b16 %v504
    %v545 = vunpack.c.l.b16 %v505
    %v546 = vpack.c.b16 %v531, %v530
    %v547 = vpack.c.b16 %v533, %v532
    %v548 = vpack.c.b16 %v535, %v534
    %v549 = vpack.c.b16 %v537, %v536
    %v550 = vpack.c.b16 %v539, %v538
    %v551 = vpack.c.b16 %v541, %v540
    %v552 = vpack.c.b16 %v543, %v542
    %v553 = vpack.c.b16 %v545, %v544
    %562 = vmatprep.subr.bf16.mxu0 0
    %563 = vmatpush1.bf16.msra.mxu0 %v553
    %564 = vmatprep.subr.bf16.mxu0 0
    %565 = vmatpush1.bf16.msra.mxu0 %v552
    %566 = vmatprep.subr.bf16.mxu0 0
    %567 = vmatpush1.bf16.msra.mxu0 %v551
    %568 = vmatprep.subr.bf16.mxu0 0
    %569 = vmatpush1.bf16.msra.mxu0 %v550
    %570 = vmatprep.subr.bf16.mxu0 0
    %571 = vmatpush1.bf16.msra.mxu0 %v549
    %572 = vmatprep.subr.bf16.mxu0 0
    %573 = vmatpush1.bf16.msra.mxu0 %v548
    %574 = vmatprep.subr.bf16.mxu0 0
    %575 = vmatpush1.bf16.msra.mxu0 %v547
    %576 = vmatprep.subr.bf16.mxu0 0
    %577 = vmatpush1.bf16.msra.mxu0 %v546
    %578 = vmatprep.subr.bf16.mxu0 0
    %579 = vmatpush2.bf16.msra.mxu0 0
    %580 = vmatprep.subr.bf16.mxu0 0
    %581 = vmatpush2.bf16.msra.mxu0 0
    %582 = vmatprep.subr.bf16.mxu0 0
    %583 = vmatpush2.bf16.msra.mxu0 0
    %584 = vmatprep.subr.bf16.mxu0 0
    %585 = vmatpush2.bf16.msra.mxu0 0
    %586 = vmatprep.subr.bf16.mxu0 0
    %587 = vmatpush2.bf16.msra.mxu0 0
    %588 = vmatprep.subr.bf16.mxu0 0
    %589 = vmatpush2.bf16.msra.mxu0 0
    %590 = vmatprep.subr.bf16.mxu0 0
    %591 = vmatpush2.bf16.msra.mxu0 0
    %592 = vmatprep.subr.bf16.mxu0 0
    %593 = vmatpush2.bf16.msra.mxu0 0
    %594 = vmatprep.mubr.bf16.mxu0 0
    %595 = vmatmul.mubr.bf16.gmra.mxu0 %v488
    %v596 = vpop.f32.mrf.mxu0
    %v597 = vadd.f32 %v512, %v596
    %v598 = vpop.f32.mrf.mxu0
    %v599 = vpop.f32.mrf.mxu0
    %v600 = vpop.f32.mrf.mxu0
    %601 = vdwg.mxu0
    %v602 = vmax.f32 %v597, 0.0
    %v603 = vpack.c.bf16 %v602, %v602
    %s604 = scalar_lea.vmem [#allocation2], 320
    %v605 = vld [vmem:[%s604] sm:$0xf]
    %v606 = vld [vmem:[%s604 + $0x4] sm:$0xf]
    %v607 = vld [vmem:[%s604 + $0x8] sm:$0xf]
    %v608 = vld [vmem:[%s604 + $0xc] sm:$0xf]
    %v609 = vld [vmem:[%s604 + $0x10] sm:$0xf]
    %v610 = vld [vmem:[%s604 + $0x14] sm:$0xf]
    %v611 = vld [vmem:[%s604 + $0x18] sm:$0xf]
    %v612 = vld [vmem:[%s604 + $0x1c] sm:$0xf]
    %v613 = vld [vmem:[%s604 + $0x20] sm:$0xf]
    %v614 = vld [vmem:[%s604 + $0x24] sm:$0xf]
    %v615 = vld [vmem:[%s604 + $0x28] sm:$0xf]
    %v616 = vld [vmem:[%s604 + $0x2c] sm:$0xf]
    %v617 = vld [vmem:[%s604 + $0x30] sm:$0xf]
    %v618 = vld [vmem:[%s604 + $0x34] sm:$0xf]
    %v619 = vld [vmem:[%s604 + $0x38] sm:$0xf]
    %v620 = vld [vmem:[%s604 + $0x3c] sm:$0xf]
    %s621 = scalar_lea.vmem %s2, 5
    %v622 = vld [vmem:[%s621] sm:$0x1]
    %v624 = vlaneseq
    %v625 = vshrl.u32 %v624, 7
    %v626 = vsub.s32 0, %v625
    %v627 = vrot.slane %v622, %v626
    %v645 = vunpack.c.l.b16 %v605
    %v646 = vunpack.c.l.b16 %v606
    %v647 = vunpack.c.l.b16 %v607
    %v648 = vunpack.c.l.b16 %v608
    %v649 = vunpack.c.l.b16 %v609
    %v650 = vunpack.c.l.b16 %v610
    %v651 = vunpack.c.l.b16 %v611
    %v652 = vunpack.c.l.b16 %v612
    %v653 = vunpack.c.l.b16 %v613
    %v654 = vunpack.c.l.b16 %v614
    %v655 = vunpack.c.l.b16 %v615
    %v656 = vunpack.c.l.b16 %v616
    %v657 = vunpack.c.l.b16 %v617
    %v658 = vunpack.c.l.b16 %v618
    %v659 = vunpack.c.l.b16 %v619
    %v660 = vunpack.c.l.b16 %v620
    %v661 = vpack.c.b16 %v646, %v645
    %v662 = vpack.c.b16 %v648, %v647
    %v663 = vpack.c.b16 %v650, %v649
    %v664 = vpack.c.b16 %v652, %v651
    %v665 = vpack.c.b16 %v654, %v653
    %v666 = vpack.c.b16 %v656, %v655
    %v667 = vpack.c.b16 %v658, %v657
    %v668 = vpack.c.b16 %v660, %v659
    %677 = vmatprep.subr.bf16.mxu0 0
    %678 = vmatpush1.bf16.msra.mxu0 %v668
    %679 = vmatprep.subr.bf16.mxu0 0
    %680 = vmatpush1.bf16.msra.mxu0 %v667
    %681 = vmatprep.subr.bf16.mxu0 0
    %682 = vmatpush1.bf16.msra.mxu0 %v666
    %683 = vmatprep.subr.bf16.mxu0 0
    %684 = vmatpush1.bf16.msra.mxu0 %v665
    %685 = vmatprep.subr.bf16.mxu0 0
    %686 = vmatpush1.bf16.msra.mxu0 %v664
    %687 = vmatprep.subr.bf16.mxu0 0
    %688 = vmatpush1.bf16.msra.mxu0 %v663
    %689 = vmatprep.subr.bf16.mxu0 0
    %690 = vmatpush1.bf16.msra.mxu0 %v662
    %691 = vmatprep.subr.bf16.mxu0 0
    %692 = vmatpush1.bf16.msra.mxu0 %v661
    %693 = vmatprep.subr.bf16.mxu0 0
    %694 = vmatpush2.bf16.msra.mxu0 0
    %695 = vmatprep.subr.bf16.mxu0 0
    %696 = vmatpush2.bf16.msra.mxu0 0
    %697 = vmatprep.subr.bf16.mxu0 0
    %698 = vmatpush2.bf16.msra.mxu0 0
    %699 = vmatprep.subr.bf16.mxu0 0
    %700 = vmatpush2.bf16.msra.mxu0 0
    %701 = vmatprep.subr.bf16.mxu0 0
    %702 = vmatpush2.bf16.msra.mxu0 0
    %703 = vmatprep.subr.bf16.mxu0 0
    %704 = vmatpush2.bf16.msra.mxu0 0
    %705 = vmatprep.subr.bf16.mxu0 0
    %706 = vmatpush2.bf16.msra.mxu0 0
    %707 = vmatprep.subr.bf16.mxu0 0
    %708 = vmatpush2.bf16.msra.mxu0 0
    %709 = vmatprep.mubr.bf16.mxu0 0
    %710 = vmatmul.mubr.bf16.gmra.mxu0 %v603
    %v711 = vpop.f32.mrf.mxu0
    %v712 = vadd.f32 %v627, %v711
    %v713 = vpop.f32.mrf.mxu0
    %v714 = vpop.f32.mrf.mxu0
    %v715 = vpop.f32.mrf.mxu0
    %716 = vdwg.mxu0
    %717 = vst [vmem:[#allocation5] sm:$0xff] %v712
    // Predicated region
    $region18: #{_mlp_forward.1} parent=1 // pred_check
      _
    $region19: #{_mlp_forward.1} parent=1 // pred_check_branch
      %719 = sbr.rel (0) target = $region21
    $region20: #{_mlp_forward.1} parent=1 // pred_region
      %s721 = ssub.s32 128, 128
      %722 = vsyncadd [#allocation4], %s721
      %s724 = sshll.u32 [#allocation5], 4
      %s725 = int_to_ptr.vmem [resolvable:$true] %s724
      %727 = dma.vmem_to_hbm [thread:$0]  %s725, 128, %s3, [#allocation4]
    $region21: #{_mlp_forward.1} parent=1 // pred_fallthru
      _
    // Predicated region
    $region22: #{_mlp_forward.1} parent=1 // pred_check
      _
    $region23: #{_mlp_forward.1} parent=1 // pred_check_branch
      %729 = sbr.rel (0) target = $region25
    $region24: #{_mlp_forward.1} parent=1 // pred_region
      %730 = dma.done [#allocation4], 128
    $region25: #{_mlp_forward.1} parent=1 // pred_fallthru
      _
    %731 = vsyncpa [#allocation3], 1
    %732 = vsyncpa [#allocation4], 1

</llo_original>
